<compile_context>
chip_gen: v6e
topology: v6e:2x2x1
jax: 0.10.0
libtpu: 0.0.40
codegen_flags: <defaults>
</compile_context>

<pallas_src>
import functools
import math

import jax
import jax.numpy as jnp
import numpy as np
from jax.experimental import pallas as pl
from jax.experimental.pallas import tpu as pltpu


# ---------------------------------------------------------------------------
# Generation-aware tiling helpers
# ---------------------------------------------------------------------------
def _round_up(a, m):
    return (a + m - 1) // m * m


def _vmem_plan():
    """Returns (working-set budget, vmem_limit_bytes, force >=2 batch tiles)."""
    cap = None
    try:
        cap = getattr(pltpu.get_tpu_info(), "vmem_capacity_bytes", None)
    except Exception:
        cap = None
    if cap is None:
        kind = ""
        try:
            kind = jax.devices()[0].device_kind.lower()
        except Exception:
            pass
        cap = (64 if "7" in kind else 128) * 1024 * 1024
    if cap > 100 * 1024 * 1024:
        # v5e / v6e: 128 MiB physical VMEM -> larger tiles, fewer grid steps / W re-streams.
        return 48 * 1024 * 1024, 96 * 1024 * 1024, False
    # v7x: 64 MiB per TensorCore, 2 TCs/chip -> tight working set, >= 2 batch tiles.
    return 22 * 1024 * 1024, 48 * 1024 * 1024, True


def _choose_tiles(B, Dp, Cp, xw_bytes, ws_budget, force_two_batch_tiles):
    """Pick (TM, Bp, TN). TN always divides Cp (= round_up(C, 128)), so there is never a
    fully-padded class tile; any padding is < 128 columns in the last tile only."""
    big = ws_budget >= 40 * 1024 * 1024
    tm_cap = 512 if big else 256
    tn_cap = 1024 if big else 512

    TM = min(tm_cap, _round_up(B, 8))
    if force_two_batch_tiles and _round_up(B, TM) // TM < 2 and TM > 8:
        TM = _round_up(max(8, (B + 1) // 2), 8)        # keep both v7x TensorCores busy
    Bp = _round_up(B, TM)

    def ws_bytes(tn):
        return (2 * (2 * TM) * Dp * xw_bytes      # stacked [xn; x_clean] tile, double-buffered
                + 2 * Dp * tn * xw_bytes          # weight tile, double-buffered
                + 2 * TM * 128 * 4                # stats slab, double-buffered
                + 8 * TM * tn * 4)                # matmul result + full-tile temporaries

    TN = 128
    t = min(tn_cap, Cp)
    while t >= 128:
        if Cp % t == 0 and ws_bytes(t) <= ws_budget:
            TN = t
            break
        t -= 128
    return TM, Bp, TN


# ---------------------------------------------------------------------------
# Fused kernel: AAM logits + per-sample CE (online logsumexp) + AAM top-1
#               + sharpened clean-branch argmax / max-prob / AAM@clean-argmax.
# Grid = (batch tiles ["parallel"], class tiles ["arbitrary", innermost reduction]).
# ---------------------------------------------------------------------------
def _aam_fused_kernel(x2_ref, lbl_ref, wt_ref, winv_ref, cmask_ref, stats_ref,
                      m_aam, l_aam, tgt_aam, arg_aam,
                      m_cln, l_cln, arg_cln, aam_at_cln,
                      *, cos_m, sin_m, th, mm, scale, inv_scale, easy_margin,
                      tile_m, tile_n, need_mask):
    j = pl.program_id(1)
    nj = pl.num_programs(1)

    @pl.when(j == 0)
    def _init():
        m_aam[...] = jnp.full_like(m_aam, -jnp.inf)
        l_aam[...] = jnp.zeros_like(l_aam)
        tgt_aam[...] = jnp.zeros_like(tgt_aam)
        arg_aam[...] = jnp.zeros_like(arg_aam)
        m_cln[...] = jnp.full_like(m_cln, -jnp.inf)
        l_cln[...] = jnp.zeros_like(l_cln)
        arg_cln[...] = jnp.zeros_like(arg_cln)
        aam_at_cln[...] = jnp.zeros_like(aam_at_cln)

    # One MXU matmul for both branches: rows [0:TM] = normalized x, [TM:2TM] = x_clean / e.
    dots = jnp.dot(x2_ref[...], wt_ref[...], preferred_element_type=jnp.float32)
    cos_s = dots[:tile_m, :] * winv_ref[...]       # scale * cosine   (TM, TN)
    z = dots[tile_m:, :]                           # clean logits / e (TM, TN)
    if need_mask:                                  # 0 / -1e30 column bias, last tile only has pads
        bias = cmask_ref[...]
        cos_s = cos_s + bias
        z = z + bias

    lbl = lbl_ref[...]                                                   # (TM, 1) int32
    cls = tile_n * j + jax.lax.broadcasted_iota(jnp.int32, cos_s.shape, 1)
    one_hot = cls == lbl                                                 # (TM, TN) bool

    # ---- margin math on the label column only (per-row scalars) ---------
    cos_t = jnp.sum(jnp.where(one_hot, cos_s, 0.0), axis=1, keepdims=True) * inv_scale
    sin_t = jnp.sqrt(jnp.clip(1.0 - cos_t * cos_t, 0.0, 1.0))
    phi_t = cos_t * cos_m - sin_t * sin_m
    if easy_margin:
        phi_t = jnp.where(cos_t > 0, phi_t, cos_t)
    else:
        phi_t = jnp.where(cos_t - th > 0, phi_t, cos_t - mm)
    phi_t_s = phi_t * scale

    out = jnp.where(one_hot, phi_t_s, cos_s)       # AAM logits, already * scale

    # ---- AAM branch: online logsumexp, top-1 argmax, target logit -------
    t_max_a = jnp.max(out, axis=1, keepdims=True)
    t_arg_a = jnp.min(jnp.where(out >= t_max_a, cls, jnp.int32(2 ** 30)),
                      axis=1, keepdims=True)
    take_a = t_max_a > m_aam[...]
    arg_aam[...] = jnp.where(take_a, t_arg_a, arg_aam[...])
    m_new = jnp.maximum(m_aam[...], t_max_a)
    l_aam[...] = (jnp.exp(m_aam[...] - m_new) * l_aam[...]
                  + jnp.sum(jnp.exp(out - m_new), axis=1, keepdims=True))
    m_aam[...] = m_new
    in_tile = jnp.logical_and(lbl >= tile_n * j, lbl < tile_n * (j + 1))
    tgt_aam[...] = tgt_aam[...] + jnp.where(in_tile, phi_t_s, 0.0)

    # ---- clean branch: online argmax / max prob / AAM logit at argmax ----
    t_max_c = jnp.max(z, axis=1, keepdims=True)
    t_arg_c = jnp.min(jnp.where(z >= t_max_c, cls, jnp.int32(2 ** 30)),
                      axis=1, keepdims=True)
    take_c = t_max_c > m_cln[...]
    arg_cln[...] = jnp.where(take_c, t_arg_c, arg_cln[...])
    aam_at_cln[...] = jnp.where(
        take_c,
        jnp.sum(jnp.where(cls == t_arg_c, out, 0.0), axis=1, keepdims=True),
        aam_at_cln[...])
    mc_new = jnp.maximum(m_cln[...], t_max_c)
    l_cln[...] = (jnp.exp(m_cln[...] - mc_new) * l_cln[...]
                  + jnp.sum(jnp.exp(z - mc_new), axis=1, keepdims=True))
    m_cln[...] = mc_new

    @pl.when(j == nj - 1)
    def _finalize():
        lse = m_aam[...] + jnp.log(l_aam[...])
        ce = lse - tgt_aam[...]
        max_prob = 1.0 / l_cln[...]                # exp(max)/sum(exp), since m_cln == max
        col = jax.lax.broadcasted_iota(jnp.int32, stats_ref.shape, 1)
        stats_ref[...] = jnp.where(
            col == 0, ce,
            jnp.where(col == 1, lse,
            jnp.where(col == 2, max_prob,
            jnp.where(col == 3, arg_cln[...].astype(jnp.float32),
            jnp.where(col == 4, arg_aam[...].astype(jnp.float32),
            jnp.where(col == 5, aam_at_cln[...], 0.0))))))


def aam_forward_fused(xn, x_clean, label, wt_pad, winv_s_pad, cmask_pad, *,
                      cos_m, sin_m, th, mm, scale, easy_margin, e, n_classes):
    """Returns per-sample (ce, lse, clean max prob, clean argmax, AAM top-1 argmax,
    AAM logit at the clean argmax)."""
    assert n_classes < (1 << 24)          # argmaxes travel through the f32 stats slab
    B, D = xn.shape
    Dp, Cp = wt_pad.shape
    need_mask = (Cp != n_classes)
    ws_budget, vmem_limit, force2 = _vmem_plan()
    xw_bytes = jnp.dtype(wt_pad.dtype).itemsize
    TM, Bp, TN = _choose_tiles(B, Dp, Cp, xw_bytes, ws_budget, force2)
    nbt = Bp // TM

    f32 = jnp.float32
    xn_p = jnp.zeros((Bp, Dp), f32).at[:B, :D].set(xn.astype(f32))
    xc_p = jnp.zeros((Bp, Dp), f32).at[:B, :D].set(x_clean.astype(f32) * (1.0 / e))
    # Interleave per batch tile: block i = [xn tile i ; x_clean tile i]  ->  one matmul/tile.
    x2 = jnp.concatenate([xn_p.reshape(nbt, TM, Dp), xc_p.reshape(nbt, TM, Dp)],
                         axis=1).reshape(nbt * 2 * TM, Dp).astype(wt_pad.dtype)
    lbl_p = jnp.zeros((Bp, 1), jnp.int32).at[:B, 0].set(label.astype(jnp.int32))

    kernel = functools.partial(
        _aam_fused_kernel, cos_m=cos_m, sin_m=sin_m, th=th, mm=mm,
        scale=float(scale), inv_scale=1.0 / float(scale),
        easy_margin=easy_margin, tile_m=TM, tile_n=TN, need_mask=need_mask)

    stats = pl.pallas_call(
        kernel,
        grid=(nbt, Cp // TN),
        in_specs=[
            pl.BlockSpec((2 * TM, Dp), lambda i, j: (i, 0)),
            pl.BlockSpec((TM, 1), lambda i, j: (i, 0)),
            pl.BlockSpec((Dp, TN), lambda i, j: (0, j)),
            pl.BlockSpec((1, TN), lambda i, j: (0, j)),
            pl.BlockSpec((1, TN), lambda i, j: (0, j)),
        ],
        out_specs=pl.BlockSpec((TM, 128), lambda i, j: (i, 0)),
        out_shape=jax.ShapeDtypeStruct((Bp, 128), jnp.float32),
        scratch_shapes=[
            pltpu.VMEM((TM, 1), jnp.float32),   # m_aam
            pltpu.VMEM((TM, 1), jnp.float32),   # l_aam
            pltpu.VMEM((TM, 1), jnp.float32),   # target AAM logit
            pltpu.VMEM((TM, 1), jnp.int32),     # AAM argmax
            pltpu.VMEM((TM, 1), jnp.float32),   # m_cln
            pltpu.VMEM((TM, 1), jnp.float32),   # l_cln
            pltpu.VMEM((TM, 1), jnp.int32),     # clean argmax
            pltpu.VMEM((TM, 1), jnp.float32),   # AAM logit at clean argmax
        ],
        compiler_params=pltpu.CompilerParams(
            dimension_semantics=("parallel", "arbitrary"),
            vmem_limit_bytes=vmem_limit),
    )(x2, lbl_p, wt_pad, winv_s_pad, cmask_pad)

    ce = stats[:B, 0]
    lse = stats[:B, 1]
    max_prob = stats[:B, 2]
    label_lc = stats[:B, 3].astype(jnp.int32)
    aam_top1 = stats[:B, 4].astype(jnp.int32)
    aam_at_lc = stats[:B, 5]
    return ce, lse, max_prob, label_lc, aam_top1, aam_at_lc


# ---------------------------------------------------------------------------
# get_pseudo_labels: argmax of softmax((x @ W.T)/e) == argmax of raw logits,
# computed online per class tile (never writes (B, C) probabilities).
# ---------------------------------------------------------------------------
def _pseudo_label_kernel(x_ref, wt_ref, cmask_ref, lab_ref, m_sc, a_sc, *,
                         tile_n, need_mask):
    j = pl.program_id(1)

    @pl.when(j == 0)
    def _init():
        m_sc[...] = jnp.full_like(m_sc, -jnp.inf)
        a_sc[...] = jnp.zeros_like(a_sc)

    z = jnp.dot(x_ref[...], wt_ref[...], preferred_element_type=jnp.float32)
    if need_mask:
        z = z + cmask_ref[...]
    cls = tile_n * j + jax.lax.broadcasted_iota(jnp.int32, z.shape, 1)
    t_max = jnp.max(z, axis=1, keepdims=True)
    t_arg = jnp.min(jnp.where(z >= t_max, cls, jnp.int32(2 ** 30)),
                    axis=1, keepdims=True)
    take = t_max > m_sc[...]
    a_sc[...] = jnp.where(take, t_arg, a_sc[...])
    m_sc[...] = jnp.maximum(m_sc[...], t_max)

    @pl.when(j == pl.num_programs(1) - 1)
    def _finalize():
        col = jax.lax.broadcasted_iota(jnp.int32, lab_ref.shape, 1)
        lab_ref[...] = jnp.where(col == 0, a_sc[...], 0)


def sharpened_pseudo_labels(x, wt_pad, cmask_pad, n_classes):
    B, D = x.shape
    Dp, Cp = wt_pad.shape
    need_mask = (Cp != n_classes)
    ws_budget, vmem_limit, force2 = _vmem_plan()
    xw_bytes = jnp.dtype(wt_pad.dtype).itemsize
    TM, Bp, TN = _choose_tiles(B, Dp, Cp, xw_bytes, ws_budget, force2)
    x_p = (jnp.zeros((Bp, Dp), jnp.float32).at[:B, :D]
           .set(x.astype(jnp.float32))).astype(wt_pad.dtype)

    kernel = functools.partial(_pseudo_label_kernel, tile_n=TN, need_mask=need_mask)
    lab = pl.pallas_call(
        kernel,
        grid=(Bp // TM, Cp // TN),
        in_specs=[pl.BlockSpec((TM, Dp), lambda i, j: (i, 0)),
                  pl.BlockSpec((Dp, TN), lambda i, j: (0, j)),
                  pl.BlockSpec((1, TN), lambda i, j: (0, j))],
        out_specs=pl.BlockSpec((TM, 128), lambda i, j: (i, 0)),
        out_shape=jax.ShapeDtypeStruct((Bp, 128), jnp.int32),
        scratch_shapes=[pltpu.VMEM((TM, 1), jnp.float32),
                        pltpu.VMEM((TM, 1), jnp.int32)],
        compiler_params=pltpu.CompilerParams(
            dimension_semantics=("parallel", "arbitrary"),
            vmem_limit_bytes=vmem_limit),
    )(x_p, wt_pad, cmask_pad)
    return lab[:B, 0]


# ---------------------------------------------------------------------------
# Module wrapper (plain JAX glue around the kernels)
# ---------------------------------------------------------------------------
class AAMSoftmaxLoss:
    def __init__(self, nOut, nClasses, margin=0.3, scale=15, easy_margin=False,
                 key=None, use_bf16_matmul=False):
        self.in_feats = nOut
        self.n_classes = nClasses
        self.m = margin
        self.s = float(scale)
        self.easy_margin = easy_margin
        self.cos_m = math.cos(margin)
        self.sin_m = math.sin(margin)
        self.th = math.cos(math.pi - margin)
        self.mm = math.sin(math.pi - margin) * margin
        self.lgl_threshold = 1000000.0
        self.lc_threshold = 0.5
        self.use_bf16_matmul = use_bf16_matmul   # bf16 streamed from HBM when enabled
        # deterministic xavier_normal_ (gain=1): std = sqrt(2 / (fan_in + fan_out))
        std = math.sqrt(2.0 / (nOut + nClasses))
        key = jax.random.PRNGKey(0) if key is None else key
        self.weight = std * jax.random.normal(key, (nClasses, nOut), jnp.float32)
        self._refresh_weight_cache()

    def _refresh_weight_cache(self):
        """Weight is a parameter: pad/transpose/cast and the scaled 1/||w_c|| row are
        built once here (call again after any weight update), not per forward()."""
        w = self.weight                                          # (C, D) f32
        C, D = w.shape
        Dp, Cp = _round_up(D, 128), _round_up(C, 128)
        wdt = jnp.bfloat16 if self.use_bf16_matmul else jnp.float32
        self._wt_pad = jnp.zeros((Dp, Cp), wdt).at[:D, :C].set(w.T.astype(wdt))
        inv = jax.lax.rsqrt(jnp.maximum(jnp.sum(w * w, axis=1), 1e-24))
        self._winv_s_pad = (jnp.zeros((1, Cp), jnp.float32)
                            .at[0, :C].set(inv * self.s))        # scale folded in
        self._cmask_pad = (jnp.full((1, Cp), -1e30, jnp.float32)
                           .at[0, :C].set(0.0))                  # padded-class bias

    @staticmethod
    def _normalize_rows(x):
        # F.normalize(x, dim=1, eps=1e-12)
        return x * jax.lax.rsqrt(
            jnp.maximum(jnp.sum(x * x, axis=1, keepdims=True), 1e-24))

    @staticmethod
    def _top1_accuracy(pred, target):
        return 100.0 * jnp.mean((pred == target).astype(jnp.float32))

    def forward(self, x, x_clean, label=None, epoch=-1):
        assert x.shape[0] == label.shape[0]
        assert x.shape[1] == self.in_feats

        xn = self._normalize_rows(x)
        ce, lse, max_vals, label_LC, aam_top1, aam_at_LC = aam_forward_fused(
            xn, x_clean, label, self._wt_pad, self._winv_s_pad, self._cmask_pad,
            cos_m=self.cos_m, sin_m=self.sin_m, th=self.th, mm=self.mm,
            scale=self.s, easy_margin=self.easy_margin, e=0.1,
            n_classes=self.n_classes)

        label = label.astype(jnp.int32)
        mask = jnp.log(ce) <= self.lgl_threshold
        maskf = mask.astype(jnp.float32)

        if epoch <= 8:
            nselect = jnp.maximum(jnp.sum(maskf), 1.0)
            loss = jnp.sum(ce * maskf) / nselect
            prec1 = self._top1_accuracy(aam_top1, label * mask.astype(label.dtype))
            return loss, prec1, ce

        # epoch > 8: pseudo-labelling with the clean branch (all stats from the kernel)
        mask_LC = max_vals > self.lc_threshold
        ce_LC = lse - aam_at_LC                                  # CE(output, label_LC)
        mask_LGL_LC = jnp.logical_and(jnp.logical_not(mask), mask_LC)
        loss = jnp.mean(ce * maskf + ce_LC * mask_LGL_LC.astype(jnp.float32))
        merged = (label * mask.astype(label.dtype)
                  + label_LC * mask_LGL_LC.astype(label.dtype))
        prec1 = self._top1_accuracy(aam_top1, merged)
        return loss, prec1, ce

    def get_pseudo_labels(self, x, label=None):
        return sharpened_pseudo_labels(x, self._wt_pad, self._cmask_pad, self.n_classes)


# ---------------------------------------------------------------------------
# Plain-JAX reference (lightweight on-device correctness check)
# ---------------------------------------------------------------------------
def _reference_forward(x, x_clean, label, weight, *, cos_m, sin_m, th, mm, s, e,
                       easy_margin):
    hp = jax.lax.Precision.HIGHEST
    xn = x / jnp.maximum(jnp.linalg.norm(x, axis=1, keepdims=True), 1e-12)
    wn = weight / jnp.maximum(jnp.linalg.norm(weight, axis=1, keepdims=True), 1e-12)
    cosine = jnp.dot(xn, wn.T, precision=hp)
    sine = jnp.sqrt(jnp.clip(1.0 - cosine * cosine, 0.0, 1.0))
    phi = cosine * cos_m - sine * sin_m
    if easy_margin:
        phi = jnp.where(cosine > 0, phi, cosine)
    else:
        phi = jnp.where(cosine - th > 0, phi, cosine - mm)
    one_hot = jax.nn.one_hot(label, weight.shape[0], dtype=jnp.float32)
    out = (one_hot * phi + (1.0 - one_hot) * cosine) * s
    lse = jax.scipy.special.logsumexp(out, axis=1)
    ce = lse - jnp.take_along_axis(out, label[:, None], axis=1)[:, 0]
    z = jnp.dot(x_clean, weight.T, precision=hp) / e
    probs = jax.nn.softmax(z, axis=1)
    return out, ce, lse, probs, z


if __name__ == "__main__":
    # 600 classes -> Cp = 640: multiple class tiles plus < 128 padded columns (mask path).
    B, nOut, nClasses = 16, 64, 600
    key = jax.random.PRNGKey(0)
    kx, kxc, kl, kw = jax.random.split(key, 4)
    x = jax.random.normal(kx, (B, nOut), jnp.float32)
    x_clean = jax.random.normal(kxc, (B, nOut), jnp.float32)
    label = jax.random.randint(kl, (B,), 0, nClasses, dtype=jnp.int32)

    loss_fn = AAMSoftmaxLoss(nOut, nClasses, margin=0.3, scale=15, key=kw)

    loss, prec1, ce = loss_fn.forward(x, x_clean, label, epoch=-1)
    jax.block_until_ready((loss, prec1, ce))
    loss2, prec2, ce2 = loss_fn.forward(x, x_clean, label, epoch=10)
    jax.block_until_ready((loss2, prec2, ce2))
    pseudo = loss_fn.get_pseudo_labels(x)
    jax.block_until_ready(pseudo)

    # ---- lightweight correctness check against a plain-JAX reference ----
    xn = loss_fn._normalize_rows(x)
    ce_k, lse_k, maxp_k, lbl_lc_k, aam_arg_k, aam_at_lc_k = aam_forward_fused(
        xn, x_clean, label, loss_fn._wt_pad, loss_fn._winv_s_pad, loss_fn._cmask_pad,
        cos_m=loss_fn.cos_m, sin_m=loss_fn.sin_m, th=loss_fn.th, mm=loss_fn.mm,
        scale=loss_fn.s, easy_margin=loss_fn.easy_margin, e=0.1, n_classes=nClasses)
    out_r, ce_r, lse_r, probs_r, z_r = _reference_forward(
        x, x_clean, label, loss_fn.weight,
        cos_m=loss_fn.cos_m, sin_m=loss_fn.sin_m, th=loss_fn.th, mm=loss_fn.mm,
        s=loss_fn.s, e=0.1, easy_margin=loss_fn.easy_margin)

    np.testing.assert_allclose(np.asarray(ce_k), np.asarray(ce_r), rtol=1e-2, atol=1e-2)
    np.testing.assert_allclose(np.asarray(lse_k), np.asarray(lse_r), rtol=1e-2, atol=1e-2)
    np.testing.assert_allclose(np.asarray(maxp_k), np.asarray(jnp.max(probs_r, axis=1)),
                               rtol=1e-2, atol=1e-2)
    np.testing.assert_allclose(
        np.asarray(aam_at_lc_k),
        np.asarray(jnp.take_along_axis(out_r, lbl_lc_k[:, None], axis=1)[:, 0]),
        rtol=1e-2, atol=1e-2)
    # argmax checks (tolerant to float ties): picked entry must be (near-)maximal
    pick_c = jnp.take_along_axis(z_r, lbl_lc_k[:, None], axis=1)[:, 0]
    assert np.all(np.asarray(jnp.max(z_r, axis=1) - pick_c) <= 1e-2)
    pick_a = jnp.take_along_axis(out_r, aam_arg_k[:, None], axis=1)[:, 0]
    assert np.all(np.asarray(jnp.max(out_r, axis=1) - pick_a) <= 1e-2)
    z_px = jnp.dot(x, loss_fn.weight.T, precision=jax.lax.Precision.HIGHEST)
    pick_p = jnp.take_along_axis(z_px, pseudo[:, None], axis=1)[:, 0]
    assert np.all(np.asarray(jnp.max(z_px, axis=1) - pick_p) <= 1e-2)
    # epoch <= 8 loss matches the reference CE-masked mean
    mask_r = (jnp.log(ce_r) <= loss_fn.lgl_threshold).astype(jnp.float32)
    loss_ref = jnp.sum(ce_r * mask_r) / jnp.maximum(jnp.sum(mask_r), 1.0)
    np.testing.assert_allclose(np.asarray(loss), np.asarray(loss_ref),
                               rtol=1e-2, atol=1e-2)

    print("KERNEL_OK")
</pallas_src>

<mosaic_0001>
module attributes {stable_mosaic.version = 11 : i64} {
  func.func @_aam_fused_kernel(%arg0: i32, %arg1: i32, %arg2: memref<32x128xf32, #tpu.memory_space<vmem>>, %arg3: memref<16x1xi32, #tpu.memory_space<vmem>>, %arg4: memref<128x640xf32, #tpu.memory_space<vmem>>, %arg5: memref<1x640xf32, #tpu.memory_space<vmem>>, %arg6: memref<1x640xf32, #tpu.memory_space<vmem>>, %arg7: memref<16x128xf32, #tpu.memory_space<vmem>>, %arg8: memref<16x1xf32, #tpu.memory_space<vmem>>, %arg9: memref<16x1xf32, #tpu.memory_space<vmem>>, %arg10: memref<16x1xf32, #tpu.memory_space<vmem>>, %arg11: memref<16x1xi32, #tpu.memory_space<vmem>>, %arg12: memref<16x1xf32, #tpu.memory_space<vmem>>, %arg13: memref<16x1xf32, #tpu.memory_space<vmem>>, %arg14: memref<16x1xi32, #tpu.memory_space<vmem>>, %arg15: memref<16x1xf32, #tpu.memory_space<vmem>>) attributes {dimension_semantics = [#tpu.dimension_semantics<parallel>, #tpu.dimension_semantics<arbitrary>], iteration_bounds = array<i64: 1, 1>, scalar_prefetch = 0 : i64, scratch_operands = 8 : i64, tpu.core_type = #tpu.core_type<tc>, window_params = [{transform_indices = @transform_0, window_bounds = array<i64: 32, 128>}, {transform_indices = @transform_1, window_bounds = array<i64: 16, 1>}, {transform_indices = @transform_2, window_bounds = array<i64: 128, 640>}, {transform_indices = @transform_3, window_bounds = array<i64: 1, 640>}, {transform_indices = @transform_4, window_bounds = array<i64: 1, 640>}, {transform_indices = @transform_5, window_bounds = array<i64: 16, 128>}]} {
    %c0_i32 = arith.constant 0 : i32
    %0 = arith.cmpi eq, %arg1, %c0_i32 : i32
    %1 = arith.extui %0 : i1 to i32
    %c0_i32_0 = arith.constant 0 : i32
    %2 = arith.cmpi ne, %1, %c0_i32_0 : i32
    scf.if %2 {
      %cst_76 = arith.constant 0xFF800000 : f32
      %135 = vector.broadcast %cst_76 : f32 to vector<16x1xf32>
      %c0_77 = arith.constant 0 : index
      %c0_78 = arith.constant 0 : index
      %136 = vector.load %arg8[%c0_77, %c0_78] : memref<16x1xf32, #tpu.memory_space<vmem>>, vector<16x1xf32>
      tpu.vector_store %arg8[%c0_77, %c0_78], %135 {strides = array<i32>} : memref<16x1xf32, #tpu.memory_space<vmem>>, vector<16x1xf32>,
      %cst_79 = arith.constant 0.000000e+00 : f32
      %137 = vector.broadcast %cst_79 : f32 to vector<16x1xf32>
      %c0_80 = arith.constant 0 : index
      %c0_81 = arith.constant 0 : index
      %138 = vector.load %arg9[%c0_80, %c0_81] : memref<16x1xf32, #tpu.memory_space<vmem>>, vector<16x1xf32>
      tpu.vector_store %arg9[%c0_80, %c0_81], %137 {strides = array<i32>} : memref<16x1xf32, #tpu.memory_space<vmem>>, vector<16x1xf32>,
      %cst_82 = arith.constant 0.000000e+00 : f32
      %139 = vector.broadcast %cst_82 : f32 to vector<16x1xf32>
      %c0_83 = arith.constant 0 : index
      %c0_84 = arith.constant 0 : index
      %140 = vector.load %arg10[%c0_83, %c0_84] : memref<16x1xf32, #tpu.memory_space<vmem>>, vector<16x1xf32>
      tpu.vector_store %arg10[%c0_83, %c0_84], %139 {strides = array<i32>} : memref<16x1xf32, #tpu.memory_space<vmem>>, vector<16x1xf32>,
      %c0_i32_85 = arith.constant 0 : i32
      %141 = vector.broadcast %c0_i32_85 : i32 to vector<16x1xi32>
      %c0_86 = arith.constant 0 : index
      %c0_87 = arith.constant 0 : index
      %142 = vector.load %arg11[%c0_86, %c0_87] : memref<16x1xi32, #tpu.memory_space<vmem>>, vector<16x1xi32>
      tpu.vector_store %arg11[%c0_86, %c0_87], %141 {strides = array<i32>} : memref<16x1xi32, #tpu.memory_space<vmem>>, vector<16x1xi32>,
      %cst_88 = arith.constant 0xFF800000 : f32
      %143 = vector.broadcast %cst_88 : f32 to vector<16x1xf32>
      %c0_89 = arith.constant 0 : index
      %c0_90 = arith.constant 0 : index
      %144 = vector.load %arg12[%c0_89, %c0_90] : memref<16x1xf32, #tpu.memory_space<vmem>>, vector<16x1xf32>
      tpu.vector_store %arg12[%c0_89, %c0_90], %143 {strides = array<i32>} : memref<16x1xf32, #tpu.memory_space<vmem>>, vector<16x1xf32>,
      %cst_91 = arith.constant 0.000000e+00 : f32
      %145 = vector.broadcast %cst_91 : f32 to vector<16x1xf32>
      %c0_92 = arith.constant 0 : index
      %c0_93 = arith.constant 0 : index
      %146 = vector.load %arg13[%c0_92, %c0_93] : memref<16x1xf32, #tpu.memory_space<vmem>>, vector<16x1xf32>
      tpu.vector_store %arg13[%c0_92, %c0_93], %145 {strides = array<i32>} : memref<16x1xf32, #tpu.memory_space<vmem>>, vector<16x1xf32>,
      %c0_i32_94 = arith.constant 0 : i32
      %147 = vector.broadcast %c0_i32_94 : i32 to vector<16x1xi32>
      %c0_95 = arith.constant 0 : index
      %c0_96 = arith.constant 0 : index
      %148 = vector.load %arg14[%c0_95, %c0_96] : memref<16x1xi32, #tpu.memory_space<vmem>>, vector<16x1xi32>
      tpu.vector_store %arg14[%c0_95, %c0_96], %147 {strides = array<i32>} : memref<16x1xi32, #tpu.memory_space<vmem>>, vector<16x1xi32>,
      %cst_97 = arith.constant 0.000000e+00 : f32
      %149 = vector.broadcast %cst_97 : f32 to vector<16x1xf32>
      %c0_98 = arith.constant 0 : index
      %c0_99 = arith.constant 0 : index
      %150 = vector.load %arg15[%c0_98, %c0_99] : memref<16x1xf32, #tpu.memory_space<vmem>>, vector<16x1xf32>
      tpu.vector_store %arg15[%c0_98, %c0_99], %149 {strides = array<i32>} : memref<16x1xf32, #tpu.memory_space<vmem>>, vector<16x1xf32>,
    } else {
    }
    %c0 = arith.constant 0 : index
    %c0_1 = arith.constant 0 : index
    %3 = vector.load %arg2[%c0, %c0_1] : memref<32x128xf32, #tpu.memory_space<vmem>>, vector<32x128xf32>
    %c0_2 = arith.constant 0 : index
    %c0_3 = arith.constant 0 : index
    %4 = vector.load %arg4[%c0_2, %c0_3] : memref<128x640xf32, #tpu.memory_space<vmem>>, vector<128x640xf32>
    %cst = arith.constant dense<0.000000e+00> : vector<32x640xf32>
    %5 = tpu.matmul %3, %4, %cst {dimension_numbers = #tpu.dot_dimension_numbers<[1], [0], [0], [1], [0, 0, 1, 1], [], []>} : vector<32x128xf32>, vector<128x640xf32>, vector<32x640xf32> -> vector<32x640xf32>
    %6 = vector.extract_strided_slice %5 {offsets = [0, 0], sizes = [16, 640], strides = [1, 1]} : vector<32x640xf32> to vector<16x640xf32>
    %c0_4 = arith.constant 0 : index
    %c0_5 = arith.constant 0 : index
    %7 = vector.load %arg5[%c0_4, %c0_5] : memref<1x640xf32, #tpu.memory_space<vmem>>, vector<1x640xf32>
    %8 = vector.broadcast %7 : vector<1x640xf32> to vector<16x640xf32>
    %9 = arith.mulf %6, %8 : vector<16x640xf32>
    %10 = vector.extract_strided_slice %5 {offsets = [16, 0], sizes = [16, 640], strides = [1, 1]} : vector<32x640xf32> to vector<16x640xf32>
    %c0_6 = arith.constant 0 : index
    %c0_7 = arith.constant 0 : index
    %11 = vector.load %arg6[%c0_6, %c0_7] : memref<1x640xf32, #tpu.memory_space<vmem>>, vector<1x640xf32>
    %12 = vector.broadcast %11 : vector<1x640xf32> to vector<16x640xf32>
    %13 = arith.addf %9, %12 : vector<16x640xf32>
    %14 = vector.broadcast %11 : vector<1x640xf32> to vector<16x640xf32>
    %15 = arith.addf %10, %14 : vector<16x640xf32>
    %c0_8 = arith.constant 0 : index
    %c0_9 = arith.constant 0 : index
    %16 = vector.load %arg3[%c0_8, %c0_9] : memref<16x1xi32, #tpu.memory_space<vmem>>, vector<16x1xi32>
    %c640_i32 = arith.constant 640 : i32
    %17 = arith.muli %c640_i32, %arg1 : i32
    %18 = tpu.iota {dimensions = array<i32: 1>} : vector<16x640xi32>
    %19 = vector.broadcast %17 : i32 to vector<16x640xi32>
    %20 = arith.addi %19, %18 : vector<16x640xi32>
    %21 = vector.broadcast %16 : vector<16x1xi32> to vector<16x640xi32>
    %22 = arith.cmpi eq, %20, %21 : vector<16x640xi32>
    %cst_10 = arith.constant 0.000000e+00 : f32
    %23 = vector.broadcast %cst_10 : f32 to vector<16x640xf32>
    %24 = arith.select %22, %13, %23 : vector<16x640xi1>, vector<16x640xf32>
    %cst_11 = arith.constant dense<0.000000e+00> : vector<16xf32>
    %25 = vector.multi_reduction <add>, %24, %cst_11 [1] : vector<16x640xf32> to vector<16xf32>
    %26 = vector.shape_cast %25 : vector<16xf32> to vector<16x1xf32>
    %cst_12 = arith.constant 0.0666666701 : f32
    %27 = vector.broadcast %cst_12 : f32 to vector<16x1xf32>
    %28 = arith.mulf %26, %27 : vector<16x1xf32>
    %29 = arith.mulf %28, %28 : vector<16x1xf32>
    %cst_13 = arith.constant 1.000000e+00 : f32
    %30 = vector.broadcast %cst_13 : f32 to vector<16x1xf32>
    %31 = arith.subf %30, %29 : vector<16x1xf32>
    %cst_14 = arith.constant 0.000000e+00 : f32
    %cst_15 = arith.constant 1.000000e+00 : f32
    %32 = vector.broadcast %cst_14 : f32 to vector<16x1xf32>
    %33 = arith.maximumf %32, %31 : vector<16x1xf32>
    %34 = vector.broadcast %cst_15 : f32 to vector<16x1xf32>
    %35 = arith.minimumf %34, %33 : vector<16x1xf32>
    %36 = math.sqrt %35 : vector<16x1xf32>
    %cst_16 = arith.constant 0.955336511 : f32
    %37 = vector.broadcast %cst_16 : f32 to vector<16x1xf32>
    %38 = arith.mulf %28, %37 : vector<16x1xf32>
    %cst_17 = arith.constant 0.295520216 : f32
    %39 = vector.broadcast %cst_17 : f32 to vector<16x1xf32>
    %40 = arith.mulf %36, %39 : vector<16x1xf32>
    %41 = arith.subf %38, %40 : vector<16x1xf32>
    %cst_18 = arith.constant -0.955336511 : f32
    %42 = vector.broadcast %cst_18 : f32 to vector<16x1xf32>
    %43 = arith.subf %28, %42 : vector<16x1xf32>
    %cst_19 = arith.constant 0.000000e+00 : f32
    %44 = vector.broadcast %cst_19 : f32 to vector<16x1xf32>
    %45 = arith.cmpf ogt, %43, %44 : vector<16x1xf32>
    %cst_20 = arith.constant 0.0886560603 : f32
    %46 = vector.broadcast %cst_20 : f32 to vector<16x1xf32>
    %47 = arith.subf %28, %46 : vector<16x1xf32>
    %48 = arith.select %45, %41, %47 : vector<16x1xi1>, vector<16x1xf32>
    %cst_21 = arith.constant 1.500000e+01 : f32
    %49 = vector.broadcast %cst_21 : f32 to vector<16x1xf32>
    %50 = arith.mulf %48, %49 : vector<16x1xf32>
    %51 = vector.shape_cast %50 : vector<16x1xf32> to vector<16x1xf32>
    %52 = vector.broadcast %51 : vector<16x1xf32> to vector<16x640xf32>
    %53 = arith.select %22, %52, %13 : vector<16x640xi1>, vector<16x640xf32>
    %cst_22 = arith.constant dense<0xFF800000> : vector<16xf32>
    %54 = vector.multi_reduction <maximumf>, %53, %cst_22 [1] : vector<16x640xf32> to vector<16xf32>
    %55 = vector.shape_cast %54 : vector<16xf32> to vector<16x1xf32>
    %56 = vector.broadcast %55 : vector<16x1xf32> to vector<16x640xf32>
    %57 = arith.cmpf oge, %53, %56 : vector<16x640xf32>
    %c1073741824_i32 = arith.constant 1073741824 : i32
    %58 = vector.broadcast %c1073741824_i32 : i32 to vector<16x640xi32>
    %59 = arith.select %57, %20, %58 : vector<16x640xi1>, vector<16x640xi32>
    %cst_23 = arith.constant dense<2147483647> : vector<16xi32>
    %60 = vector.multi_reduction <minsi>, %59, %cst_23 [1] : vector<16x640xi32> to vector<16xi32>
    %61 = vector.shape_cast %60 : vector<16xi32> to vector<16x1xi32>
    %c0_24 = arith.constant 0 : index
    %c0_25 = arith.constant 0 : index
    %62 = vector.load %arg8[%c0_24, %c0_25] : memref<16x1xf32, #tpu.memory_space<vmem>>, vector<16x1xf32>
    %63 = arith.cmpf ogt, %55, %62 : vector<16x1xf32>
    %c0_26 = arith.constant 0 : index
    %c0_27 = arith.constant 0 : index
    %64 = vector.load %arg11[%c0_26, %c0_27] : memref<16x1xi32, #tpu.memory_space<vmem>>, vector<16x1xi32>
    %65 = arith.select %63, %61, %64 : vector<16x1xi1>, vector<16x1xi32>
    %c0_28 = arith.constant 0 : index
    %c0_29 = arith.constant 0 : index
    %66 = vector.load %arg11[%c0_28, %c0_29] : memref<16x1xi32, #tpu.memory_space<vmem>>, vector<16x1xi32>
    tpu.vector_store %arg11[%c0_28, %c0_29], %65 {strides = array<i32>} : memref<16x1xi32, #tpu.memory_space<vmem>>, vector<16x1xi32>,
    %c0_30 = arith.constant 0 : index
    %c0_31 = arith.constant 0 : index
    %67 = vector.load %arg8[%c0_30, %c0_31] : memref<16x1xf32, #tpu.memory_space<vmem>>, vector<16x1xf32>
    %68 = arith.maximumf %67, %55 : vector<16x1xf32>
    %c0_32 = arith.constant 0 : index
    %c0_33 = arith.constant 0 : index
    %69 = vector.load %arg8[%c0_32, %c0_33] : memref<16x1xf32, #tpu.memory_space<vmem>>, vector<16x1xf32>
    %70 = arith.subf %69, %68 : vector<16x1xf32>
    %71 = math.exp %70 : vector<16x1xf32>
    %c0_34 = arith.constant 0 : index
    %c0_35 = arith.constant 0 : index
    %72 = vector.load %arg9[%c0_34, %c0_35] : memref<16x1xf32, #tpu.memory_space<vmem>>, vector<16x1xf32>
    %73 = arith.mulf %71, %72 : vector<16x1xf32>
    %74 = vector.broadcast %68 : vector<16x1xf32> to vector<16x640xf32>
    %75 = arith.subf %53, %74 : vector<16x640xf32>
    %76 = math.exp %75 : vector<16x640xf32>
    %cst_36 = arith.constant dense<0.000000e+00> : vector<16xf32>
    %77 = vector.multi_reduction <add>, %76, %cst_36 [1] : vector<16x640xf32> to vector<16xf32>
    %78 = vector.shape_cast %77 : vector<16xf32> to vector<16x1xf32>
    %79 = arith.addf %73, %78 : vector<16x1xf32>
    %c0_37 = arith.constant 0 : index
    %c0_38 = arith.constant 0 : index
    %80 = vector.load %arg9[%c0_37, %c0_38] : memref<16x1xf32, #tpu.memory_space<vmem>>, vector<16x1xf32>
    tpu.vector_store %arg9[%c0_37, %c0_38], %79 {strides = array<i32>} : memref<16x1xf32, #tpu.memory_space<vmem>>, vector<16x1xf32>,
    %c0_39 = arith.constant 0 : index
    %c0_40 = arith.constant 0 : index
    %81 = vector.load %arg8[%c0_39, %c0_40] : memref<16x1xf32, #tpu.memory_space<vmem>>, vector<16x1xf32>
    tpu.vector_store %arg8[%c0_39, %c0_40], %68 {strides = array<i32>} : memref<16x1xf32, #tpu.memory_space<vmem>>, vector<16x1xf32>,
    %c640_i32_41 = arith.constant 640 : i32
    %82 = arith.muli %c640_i32_41, %arg1 : i32
    %83 = vector.broadcast %82 : i32 to vector<16x1xi32>
    %84 = arith.cmpi sge, %16, %83 : vector<16x1xi32>
    %c1_i32 = arith.constant 1 : i32
    %85 = arith.addi %arg1, %c1_i32 : i32
    %c640_i32_42 = arith.constant 640 : i32
    %86 = arith.muli %c640_i32_42, %85 : i32
    %87 = vector.broadcast %86 : i32 to vector<16x1xi32>
    %88 = arith.cmpi slt, %16, %87 : vector<16x1xi32>
    %89 = arith.andi %84, %88 : vector<16x1xi1>
    %c0_43 = arith.constant 0 : index
    %c0_44 = arith.constant 0 : index
    %90 = vector.load %arg10[%c0_43, %c0_44] : memref<16x1xf32, #tpu.memory_space<vmem>>, vector<16x1xf32>
    %cst_45 = arith.constant 0.000000e+00 : f32
    %91 = vector.broadcast %cst_45 : f32 to vector<16x1xf32>
    %92 = arith.select %89, %50, %91 : vector<16x1xi1>, vector<16x1xf32>
    %93 = arith.addf %90, %92 : vector<16x1xf32>
    %c0_46 = arith.constant 0 : index
    %c0_47 = arith.constant 0 : index
    %94 = vector.load %arg10[%c0_46, %c0_47] : memref<16x1xf32, #tpu.memory_space<vmem>>, vector<16x1xf32>
    tpu.vector_store %arg10[%c0_46, %c0_47], %93 {strides = array<i32>} : memref<16x1xf32, #tpu.memory_space<vmem>>, vector<16x1xf32>,
    %cst_48 = arith.constant dense<0xFF800000> : vector<16xf32>
    %95 = vector.multi_reduction <maximumf>, %15, %cst_48 [1] : vector<16x640xf32> to vector<16xf32>
    %96 = vector.shape_cast %95 : vector<16xf32> to vector<16x1xf32>
    %97 = vector.broadcast %96 : vector<16x1xf32> to vector<16x640xf32>
    %98 = arith.cmpf oge, %15, %97 : vector<16x640xf32>
    %c1073741824_i32_49 = arith.constant 1073741824 : i32
    %99 = vector.broadcast %c1073741824_i32_49 : i32 to vector<16x640xi32>
    %100 = arith.select %98, %20, %99 : vector<16x640xi1>, vector<16x640xi32>
    %cst_50 = arith.constant dense<2147483647> : vector<16xi32>
    %101 = vector.multi_reduction <minsi>, %100, %cst_50 [1] : vector<16x640xi32> to vector<16xi32>
    %102 = vector.shape_cast %101 : vector<16xi32> to vector<16x1xi32>
    %c0_51 = arith.constant 0 : index
    %c0_52 = arith.constant 0 : index
    %103 = vector.load %arg12[%c0_51, %c0_52] : memref<16x1xf32, #tpu.memory_space<vmem>>, vector<16x1xf32>
    %104 = arith.cmpf ogt, %96, %103 : vector<16x1xf32>
    %c0_53 = arith.constant 0 : index
    %c0_54 = arith.constant 0 : index
    %105 = vector.load %arg14[%c0_53, %c0_54] : memref<16x1xi32, #tpu.memory_space<vmem>>, vector<16x1xi32>
    %106 = arith.select %104, %102, %105 : vector<16x1xi1>, vector<16x1xi32>
    %c0_55 = arith.constant 0 : index
    %c0_56 = arith.constant 0 : index
    %107 = vector.load %arg14[%c0_55, %c0_56] : memref<16x1xi32, #tpu.memory_space<vmem>>, vector<16x1xi32>
    tpu.vector_store %arg14[%c0_55, %c0_56], %106 {strides = array<i32>} : memref<16x1xi32, #tpu.memory_space<vmem>>, vector<16x1xi32>,
    %108 = vector.broadcast %102 : vector<16x1xi32> to vector<16x640xi32>
    %109 = arith.cmpi eq, %20, %108 : vector<16x640xi32>
    %cst_57 = arith.constant 0.000000e+00 : f32
    %110 = vector.broadcast %cst_57 : f32 to vector<16x640xf32>
    %111 = arith.select %109, %53, %110 : vector<16x640xi1>, vector<16x640xf32>
    %cst_58 = arith.constant dense<0.000000e+00> : vector<16xf32>
    %112 = vector.multi_reduction <add>, %111, %cst_58 [1] : vector<16x640xf32> to vector<16xf32>
    %113 = vector.shape_cast %112 : vector<16xf32> to vector<16x1xf32>
    %c0_59 = arith.constant 0 : index
    %c0_60 = arith.constant 0 : index
    %114 = vector.load %arg15[%c0_59, %c0_60] : memref<16x1xf32, #tpu.memory_space<vmem>>, vector<16x1xf32>
    %115 = arith.select %104, %113, %114 : vector<16x1xi1>, vector<16x1xf32>
    %c0_61 = arith.constant 0 : index
    %c0_62 = arith.constant 0 : index
    %116 = vector.load %arg15[%c0_61, %c0_62] : memref<16x1xf32, #tpu.memory_space<vmem>>, vector<16x1xf32>
    tpu.vector_store %arg15[%c0_61, %c0_62], %115 {strides = array<i32>} : memref<16x1xf32, #tpu.memory_space<vmem>>, vector<16x1xf32>,
    %c0_63 = arith.constant 0 : index
    %c0_64 = arith.constant 0 : index
    %117 = vector.load %arg12[%c0_63, %c0_64] : memref<16x1xf32, #tpu.memory_space<vmem>>, vector<16x1xf32>
    %118 = arith.maximumf %117, %96 : vector<16x1xf32>
    %c0_65 = arith.constant 0 : index
    %c0_66 = arith.constant 0 : index
    %119 = vector.load %arg12[%c0_65, %c0_66] : memref<16x1xf32, #tpu.memory_space<vmem>>, vector<16x1xf32>
    %120 = arith.subf %119, %118 : vector<16x1xf32>
    %121 = math.exp %120 : vector<16x1xf32>
    %c0_67 = arith.constant 0 : index
    %c0_68 = arith.constant 0 : index
    %122 = vector.load %arg13[%c0_67, %c0_68] : memref<16x1xf32, #tpu.memory_space<vmem>>, vector<16x1xf32>
    %123 = arith.mulf %121, %122 : vector<16x1xf32>
    %124 = vector.broadcast %118 : vector<16x1xf32> to vector<16x640xf32>
    %125 = arith.subf %15, %124 : vector<16x640xf32>
    %126 = math.exp %125 : vector<16x640xf32>
    %cst_69 = arith.constant dense<0.000000e+00> : vector<16xf32>
    %127 = vector.multi_reduction <add>, %126, %cst_69 [1] : vector<16x640xf32> to vector<16xf32>
    %128 = vector.shape_cast %127 : vector<16xf32> to vector<16x1xf32>
    %129 = arith.addf %123, %128 : vector<16x1xf32>
    %c0_70 = arith.constant 0 : index
    %c0_71 = arith.constant 0 : index
    %130 = vector.load %arg13[%c0_70, %c0_71] : memref<16x1xf32, #tpu.memory_space<vmem>>, vector<16x1xf32>
    tpu.vector_store %arg13[%c0_70, %c0_71], %129 {strides = array<i32>} : memref<16x1xf32, #tpu.memory_space<vmem>>, vector<16x1xf32>,
    %c0_72 = arith.constant 0 : index
    %c0_73 = arith.constant 0 : index
    %131 = vector.load %arg12[%c0_72, %c0_73] : memref<16x1xf32, #tpu.memory_space<vmem>>, vector<16x1xf32>
    tpu.vector_store %arg12[%c0_72, %c0_73], %118 {strides = array<i32>} : memref<16x1xf32, #tpu.memory_space<vmem>>, vector<16x1xf32>,
    %c0_i32_74 = arith.constant 0 : i32
    %132 = arith.cmpi eq, %arg1, %c0_i32_74 : i32
    %133 = arith.extui %132 : i1 to i32
    %c0_i32_75 = arith.constant 0 : i32
    %134 = arith.cmpi ne, %133, %c0_i32_75 : i32
    scf.if %134 {
      %c0_76 = arith.constant 0 : index
      %c0_77 = arith.constant 0 : index
      %135 = vector.load %arg8[%c0_76, %c0_77] : memref<16x1xf32, #tpu.memory_space<vmem>>, vector<16x1xf32>
      %c0_78 = arith.constant 0 : index
      %c0_79 = arith.constant 0 : index
      %136 = vector.load %arg9[%c0_78, %c0_79] : memref<16x1xf32, #tpu.memory_space<vmem>>, vector<16x1xf32>
      %137 = math.log %136 : vector<16x1xf32>
      %138 = arith.addf %135, %137 : vector<16x1xf32>
      %c0_80 = arith.constant 0 : index
      %c0_81 = arith.constant 0 : index
      %139 = vector.load %arg10[%c0_80, %c0_81] : memref<16x1xf32, #tpu.memory_space<vmem>>, vector<16x1xf32>
      %140 = arith.subf %138, %139 : vector<16x1xf32>
      %c0_82 = arith.constant 0 : index
      %c0_83 = arith.constant 0 : index
      %141 = vector.load %arg13[%c0_82, %c0_83] : memref<16x1xf32, #tpu.memory_space<vmem>>, vector<16x1xf32>
      %cst_84 = arith.constant 1.000000e+00 : f32
      %142 = vector.broadcast %cst_84 : f32 to vector<16x1xf32>
      %143 = arith.divf %142, %141 : vector<16x1xf32>
      %144 = tpu.iota {dimensions = array<i32: 1>} : vector<16x128xi32>
      %c0_i32_85 = arith.constant 0 : i32
      %145 = vector.broadcast %c0_i32_85 : i32 to vector<16x128xi32>
      %146 = arith.cmpi eq, %144, %145 : vector<16x128xi32>
      %c1_i32_86 = arith.constant 1 : i32
      %147 = vector.broadcast %c1_i32_86 : i32 to vector<16x128xi32>
      %148 = arith.cmpi eq, %144, %147 : vector<16x128xi32>
      %c2_i32 = arith.constant 2 : i32
      %149 = vector.broadcast %c2_i32 : i32 to vector<16x128xi32>
      %150 = arith.cmpi eq, %144, %149 : vector<16x128xi32>
      %c3_i32 = arith.constant 3 : i32
      %151 = vector.broadcast %c3_i32 : i32 to vector<16x128xi32>
      %152 = arith.cmpi eq, %144, %151 : vector<16x128xi32>
      %c0_87 = arith.constant 0 : index
      %c0_88 = arith.constant 0 : index
      %153 = vector.load %arg14[%c0_87, %c0_88] : memref<16x1xi32, #tpu.memory_space<vmem>>, vector<16x1xi32>
      %154 = arith.sitofp %153 : vector<16x1xi32> to vector<16x1xf32>
      %c4_i32 = arith.constant 4 : i32
      %155 = vector.broadcast %c4_i32 : i32 to vector<16x128xi32>
      %156 = arith.cmpi eq, %144, %155 : vector<16x128xi32>
      %c0_89 = arith.constant 0 : index
      %c0_90 = arith.constant 0 : index
      %157 = vector.load %arg11[%c0_89, %c0_90] : memref<16x1xi32, #tpu.memory_space<vmem>>, vector<16x1xi32>
      %158 = arith.sitofp %157 : vector<16x1xi32> to vector<16x1xf32>
      %c5_i32 = arith.constant 5 : i32
      %159 = vector.broadcast %c5_i32 : i32 to vector<16x128xi32>
      %160 = arith.cmpi eq, %144, %159 : vector<16x128xi32>
      %c0_91 = arith.constant 0 : index
      %c0_92 = arith.constant 0 : index
      %161 = vector.load %arg15[%c0_91, %c0_92] : memref<16x1xf32, #tpu.memory_space<vmem>>, vector<16x1xf32>
      %cst_93 = arith.constant 0.000000e+00 : f32
      %162 = vector.shape_cast %161 : vector<16x1xf32> to vector<16x1xf32>
      %163 = vector.broadcast %162 : vector<16x1xf32> to vector<16x128xf32>
      %164 = vector.broadcast %cst_93 : f32 to vector<16x128xf32>
      %165 = arith.select %160, %163, %164 : vector<16x128xi1>, vector<16x128xf32>
      %166 = vector.shape_cast %158 : vector<16x1xf32> to vector<16x1xf32>
      %167 = vector.broadcast %166 : vector<16x1xf32> to vector<16x128xf32>
      %168 = arith.select %156, %167, %165 : vector<16x128xi1>, vector<16x128xf32>
      %169 = vector.shape_cast %154 : vector<16x1xf32> to vector<16x1xf32>
      %170 = vector.broadcast %169 : vector<16x1xf32> to vector<16x128xf32>
      %171 = arith.select %152, %170, %168 : vector<16x128xi1>, vector<16x128xf32>
      %172 = vector.shape_cast %143 : vector<16x1xf32> to vector<16x1xf32>
      %173 = vector.broadcast %172 : vector<16x1xf32> to vector<16x128xf32>
      %174 = arith.select %150, %173, %171 : vector<16x128xi1>, vector<16x128xf32>
      %175 = vector.shape_cast %138 : vector<16x1xf32> to vector<16x1xf32>
      %176 = vector.broadcast %175 : vector<16x1xf32> to vector<16x128xf32>
      %177 = arith.select %148, %176, %174 : vector<16x128xi1>, vector<16x128xf32>
      %178 = vector.shape_cast %140 : vector<16x1xf32> to vector<16x1xf32>
      %179 = vector.broadcast %178 : vector<16x1xf32> to vector<16x128xf32>
      %180 = arith.select %146, %179, %177 : vector<16x128xi1>, vector<16x128xf32>
      %c0_94 = arith.constant 0 : index
      %c0_95 = arith.constant 0 : index
      %181 = vector.load %arg7[%c0_94, %c0_95] : memref<16x128xf32, #tpu.memory_space<vmem>>, vector<16x128xf32>
      tpu.vector_store %arg7[%c0_94, %c0_95], %180 {strides = array<i32>} : memref<16x128xf32, #tpu.memory_space<vmem>>, vector<16x128xf32>,
    } else {
    }
    return
  }
  func.func @transform_0(%arg0: i32, %arg1: i32) -> (i32, i32) {
    %c0_i32 = arith.constant 0 : i32
    %c0_i32_0 = arith.constant 0 : i32
    return %arg0, %c0_i32 : i32, i32
  }
  func.func @transform_1(%arg0: i32, %arg1: i32) -> (i32, i32) {
    %c0_i32 = arith.constant 0 : i32
    %c0_i32_0 = arith.constant 0 : i32
    return %arg0, %c0_i32 : i32, i32
  }
  func.func @transform_2(%arg0: i32, %arg1: i32) -> (i32, i32) {
    %c0_i32 = arith.constant 0 : i32
    %c0_i32_0 = arith.constant 0 : i32
    return %c0_i32, %arg1 : i32, i32
  }
  func.func @transform_3(%arg0: i32, %arg1: i32) -> (i32, i32) {
    %c0_i32 = arith.constant 0 : i32
    %c0_i32_0 = arith.constant 0 : i32
    return %c0_i32, %arg1 : i32, i32
  }
  func.func @transform_4(%arg0: i32, %arg1: i32) -> (i32, i32) {
    %c0_i32 = arith.constant 0 : i32
    %c0_i32_0 = arith.constant 0 : i32
    return %c0_i32, %arg1 : i32, i32
  }
  func.func @transform_5(%arg0: i32, %arg1: i32) -> (i32, i32) {
    %c0_i32 = arith.constant 0 : i32
    %c0_i32_0 = arith.constant 0 : i32
    return %arg0, %c0_i32 : i32, i32
  }
}

</mosaic_0001>

<llo_original>
// kernel: tpu_custom_call.1
$region0: #{tpu_custom_call.1}
  #allocation0 [shape = 'u32[]', space=smem, size = 0x4, offset = 0x4, fixed_abs, tag = 'smem constant byte address 0x4 - core index']
  #allocation1 [shape = 'u32[144,128]{1,0:T(1,128)}', space=vmem, size = 0x12000, scoped, tag = 'internal scratch']
  #allocation2 [shape = 'f32[16,1]{1,0:T(8,128)}', space=vmem, size = 0x2000, scoped, tag = 'scratch operand']
  #allocation3 [shape = 'f32[16,1]{1,0:T(8,128)}', space=vmem, size = 0x2000, scoped, tag = 'scratch operand']
  #allocation4 [shape = 'f32[16,1]{1,0:T(8,128)}', space=vmem, size = 0x2000, scoped, tag = 'scratch operand']
  #allocation5 [shape = 's32[16,1]{1,0:T(8,128)}', space=vmem, size = 0x2000, scoped, tag = 'scratch operand']
  #allocation6 [shape = 'f32[16,1]{1,0:T(8,128)}', space=vmem, size = 0x2000, scoped, tag = 'scratch operand']
  #allocation7 [shape = 'f32[16,1]{1,0:T(8,128)}', space=vmem, size = 0x2000, scoped, tag = 'scratch operand']
  #allocation8 [shape = 's32[16,1]{1,0:T(8,128)}', space=vmem, size = 0x2000, scoped, tag = 'scratch operand']
  #allocation9 [shape = 'f32[16,1]{1,0:T(8,128)}', space=vmem, size = 0x2000, scoped, tag = 'scratch operand']
  %s0 = inlined_call_operand.hbm [shape: f32[32,128], index: 0, kind: input, shape index: {}]
  %s1 = inlined_call_operand.vmem [shape: s32[16,1], index: 1, kind: input, shape index: {}]
  %s2 = inlined_call_operand.hbm [shape: f32[128,640], index: 2, kind: input, shape index: {}]
  %s3 = inlined_call_operand.vmem [shape: f32[1,640], index: 3, kind: input, shape index: {}]
  %s4 = inlined_call_operand.vmem [shape: f32[1,640], index: 4, kind: input, shape index: {}]
  %s5 = inlined_call_operand.hbm [shape: f32[16,128], index: 5, kind: output, shape index: {}]
  %s6 = sld [smem:[#allocation0]]
  $region46: #{tpu_custom_call.1} parent=0
    _
  %s8 = ssub.s32 1, %s6
  %s9 = scalar_select 0, %s8, %s6
  $region1: #{tpu_custom_call.1} parent=0
    #allocation10 [shape = 'u8[16384]{0}', space=vmem, size = 0x4000, scoped, tag = 'input window, operand 0, single buffered']
    #allocation11 [shape = 's32[1]{0}', space=sflag, size = 0x4, scoped, tag = 'scoped memory for tpu_custom_call.1']
    #allocation12 [shape = 's32[1]{0}', space=sflag, size = 0x4, scoped, tag = 'scoped memory for tpu_custom_call.1']
    #allocation13 [shape = 'u8[327680]{0}', space=vmem, size = 0x50000, scoped, tag = 'input window, operand 2, single buffered']
    #allocation14 [shape = 's32[1]{0}', space=sflag, size = 0x4, scoped, tag = 'scoped memory for tpu_custom_call.1']
    #allocation15 [shape = 'u8[8192]{0}', space=vmem, size = 0x2000, scoped, tag = 'output window, operand 0, single buffered']
    %10 = vsyncpa [#allocation11], 0
    %11 = vsyncpa [#allocation14], 0
    %12 = vsyncpa [#allocation12], 0
    // Predicated region
    $region2: #{tpu_custom_call.1} parent=1 // pred_check
      _
    $region3: #{tpu_custom_call.1} parent=1 // pred_check_branch
      %14 = sbr.rel (0) target = $region5
    $region4: #{tpu_custom_call.1} parent=1 // pred_region
      %s16 = ssub.s32 512, 512
      %17 = vsyncadd [#allocation11], %s16
      %s18 = sshll.u32 [#allocation10], 4
      %s19 = int_to_ptr.vmem [resolvable:$true] %s18
      %24 = dma.hbm_to_vmem [thread:$0]  %s0, 512, %s19, [#allocation11], 128, 128, 8
    $region5: #{tpu_custom_call.1} parent=1 // pred_fallthru
      _
    // Predicated region
    $region6: #{tpu_custom_call.1} parent=1 // pred_check
      _
    $region7: #{tpu_custom_call.1} parent=1 // pred_check_branch
      %26 = sbr.rel (0) target = $region9
    $region8: #{tpu_custom_call.1} parent=1 // pred_region
      _
    $region9: #{tpu_custom_call.1} parent=1 // pred_fallthru
      _
    // Predicated region
    $region10: #{tpu_custom_call.1} parent=1 // pred_check
      _
    $region11: #{tpu_custom_call.1} parent=1 // pred_check_branch
      %28 = sbr.rel (0) target = $region13
    $region12: #{tpu_custom_call.1} parent=1 // pred_region
      %s30 = ssub.s32 10240, 10240
      %31 = vsyncadd [#allocation14], %s30
      %s32 = sshll.u32 [#allocation13], 4
      %s33 = int_to_ptr.vmem [resolvable:$true] %s32
      %38 = dma.hbm_to_vmem [thread:$0]  %s2, 10240, %s33, [#allocation14], 640, 640, 40
    $region13: #{tpu_custom_call.1} parent=1 // pred_fallthru
      _
    // Predicated region
    $region14: #{tpu_custom_call.1} parent=1 // pred_check
      _
    $region15: #{tpu_custom_call.1} parent=1 // pred_check_branch
      %40 = sbr.rel (0) target = $region17
    $region16: #{tpu_custom_call.1} parent=1 // pred_region
      _
    $region17: #{tpu_custom_call.1} parent=1 // pred_fallthru
      _
    // Predicated region
    $region18: #{tpu_custom_call.1} parent=1 // pred_check
      _
    $region19: #{tpu_custom_call.1} parent=1 // pred_check_branch
      %42 = sbr.rel (0) target = $region21
    $region20: #{tpu_custom_call.1} parent=1 // pred_region
      _
    $region21: #{tpu_custom_call.1} parent=1 // pred_fallthru
      _
    // Predicated region
    $region22: #{tpu_custom_call.1} parent=1 // pred_check
      _
    $region23: #{tpu_custom_call.1} parent=1 // pred_check_branch
      %44 = sbr.rel (0) target = $region25
    $region24: #{tpu_custom_call.1} parent=1 // pred_region
      %45 = dma.done [#allocation11], 512
    $region25: #{tpu_custom_call.1} parent=1 // pred_fallthru
      _
    // Predicated region
    $region26: #{tpu_custom_call.1} parent=1 // pred_check
      _
    $region27: #{tpu_custom_call.1} parent=1 // pred_check_branch
      %47 = sbr.rel (0) target = $region29
    $region28: #{tpu_custom_call.1} parent=1 // pred_region
      %48 = dma.done [#allocation14], 10240
    $region29: #{tpu_custom_call.1} parent=1 // pred_fallthru
      _
    %p49 = scmp.eq.s32.totalorder 0, 0
    // Predicated region
    $region30: #{tpu_custom_call.1} parent=1 // pred_check
      %p50 = pneg %p49
    $region31: #{tpu_custom_call.1} parent=1 // pred_check_branch
      %52 = sbr.rel (%p50) target = $region33
    $region32: #{tpu_custom_call.1} parent=1 // pred_region
      %vm53 = vcmask 7168
      %54 = vst.msk [vmem:[#allocation2] sm:$0xff] %vm53, -inf
      %55 = vst.msk [vmem:[#allocation2 + $0x8] sm:$0xff] %vm53, -inf
      %56 = vst.msk [vmem:[#allocation3] sm:$0xff] %vm53, 0.0
      %57 = vst.msk [vmem:[#allocation3 + $0x8] sm:$0xff] %vm53, 0.0
      %58 = vst.msk [vmem:[#allocation4] sm:$0xff] %vm53, 0.0
      %59 = vst.msk [vmem:[#allocation4 + $0x8] sm:$0xff] %vm53, 0.0
      %60 = vst.msk [vmem:[#allocation5] sm:$0xff] %vm53, 0
      %61 = vst.msk [vmem:[#allocation5 + $0x8] sm:$0xff] %vm53, 0
      %62 = vst.msk [vmem:[#allocation6] sm:$0xff] %vm53, -inf
      %63 = vst.msk [vmem:[#allocation6 + $0x8] sm:$0xff] %vm53, -inf
      %64 = vst.msk [vmem:[#allocation7] sm:$0xff] %vm53, 0.0
      %65 = vst.msk [vmem:[#allocation7 + $0x8] sm:$0xff] %vm53, 0.0
      %66 = vst.msk [vmem:[#allocation8] sm:$0xff] %vm53, 0
      %67 = vst.msk [vmem:[#allocation8 + $0x8] sm:$0xff] %vm53, 0
      %68 = vst.msk [vmem:[#allocation9] sm:$0xff] %vm53, 0.0
      %69 = vst.msk [vmem:[#allocation9 + $0x8] sm:$0xff] %vm53, 0.0
    $region33: #{tpu_custom_call.1} parent=1 // pred_fallthru
      _
    %v70 = vld [vmem:[#allocation10] sm:$0xff]
    %v71 = vld [vmem:[#allocation10 + $0x8] sm:$0xff]
    %v72 = vld [vmem:[#allocation10 + $0x10] sm:$0xff]
    %v73 = vld [vmem:[#allocation10 + $0x18] sm:$0xff]
    %v74 = vld [vmem:[#allocation13] sm:$0xff]
    %v75 = vld [vmem:[#allocation13 + $0x8] sm:$0xff]
    %v76 = vld [vmem:[#allocation13 + $0x10] sm:$0xff]
    %v77 = vld [vmem:[#allocation13 + $0x18] sm:$0xff]
    %v78 = vld [vmem:[#allocation13 + $0x20] sm:$0xff]
    %v79 = vld [vmem:[#allocation13 + $0x28] sm:$0xff]
    %v80 = vld [vmem:[#allocation13 + $0x30] sm:$0xff]
    %v81 = vld [vmem:[#allocation13 + $0x38] sm:$0xff]
    %v82 = vld [vmem:[#allocation13 + $0x40] sm:$0xff]
    %v83 = vld [vmem:[#allocation13 + $0x48] sm:$0xff]
    %v84 = vld [vmem:[#allocation13 + $0x50] sm:$0xff]
    %v85 = vld [vmem:[#allocation13 + $0x58] sm:$0xff]
    %v86 = vld [vmem:[#allocation13 + $0x60] sm:$0xff]
    %v87 = vld [vmem:[#allocation13 + $0x68] sm:$0xff]
    %v88 = vld [vmem:[#allocation13 + $0x70] sm:$0xff]
    %v89 = vld [vmem:[#allocation13 + $0x78] sm:$0xff]
    %v90 = vld [vmem:[#allocation13 + $0x80] sm:$0xff]
    %v91 = vld [vmem:[#allocation13 + $0x88] sm:$0xff]
    %v92 = vld [vmem:[#allocation13 + $0x90] sm:$0xff]
    %v93 = vld [vmem:[#allocation13 + $0x98] sm:$0xff]
    %v94 = vld [vmem:[#allocation13 + $0xa0] sm:$0xff]
    %v95 = vld [vmem:[#allocation13 + $0xa8] sm:$0xff]
    %v96 = vld [vmem:[#allocation13 + $0xb0] sm:$0xff]
    %v97 = vld [vmem:[#allocation13 + $0xb8] sm:$0xff]
    %v98 = vld [vmem:[#allocation13 + $0xc0] sm:$0xff]
    %v99 = vld [vmem:[#allocation13 + $0xc8] sm:$0xff]
    %v100 = vld [vmem:[#allocation13 + $0xd0] sm:$0xff]
    %v101 = vld [vmem:[#allocation13 + $0xd8] sm:$0xff]
    %v102 = vld [vmem:[#allocation13 + $0xe0] sm:$0xff]
    %v103 = vld [vmem:[#allocation13 + $0xe8] sm:$0xff]
    %v104 = vld [vmem:[#allocation13 + $0xf0] sm:$0xff]
    %v105 = vld [vmem:[#allocation13 + $0xf8] sm:$0xff]
    %v106 = vld [vmem:[#allocation13 + $0x100] sm:$0xff]
    %v107 = vld [vmem:[#allocation13 + $0x108] sm:$0xff]
    %v108 = vld [vmem:[#allocation13 + $0x110] sm:$0xff]
    %v109 = vld [vmem:[#allocation13 + $0x118] sm:$0xff]
    %v110 = vld [vmem:[#allocation13 + $0x120] sm:$0xff]
    %v111 = vld [vmem:[#allocation13 + $0x128] sm:$0xff]
    %v112 = vld [vmem:[#allocation13 + $0x130] sm:$0xff]
    %v113 = vld [vmem:[#allocation13 + $0x138] sm:$0xff]
    %v114 = vld [vmem:[#allocation13 + $0x140] sm:$0xff]
    %v115 = vld [vmem:[#allocation13 + $0x148] sm:$0xff]
    %v116 = vld [vmem:[#allocation13 + $0x150] sm:$0xff]
    %v117 = vld [vmem:[#allocation13 + $0x158] sm:$0xff]
    %v118 = vld [vmem:[#allocation13 + $0x160] sm:$0xff]
    %v119 = vld [vmem:[#allocation13 + $0x168] sm:$0xff]
    %v120 = vld [vmem:[#allocation13 + $0x170] sm:$0xff]
    %v121 = vld [vmem:[#allocation13 + $0x178] sm:$0xff]
    %v122 = vld [vmem:[#allocation13 + $0x180] sm:$0xff]
    %v123 = vld [vmem:[#allocation13 + $0x188] sm:$0xff]
    %v124 = vld [vmem:[#allocation13 + $0x190] sm:$0xff]
    %v125 = vld [vmem:[#allocation13 + $0x198] sm:$0xff]
    %v126 = vld [vmem:[#allocation13 + $0x1a0] sm:$0xff]
    %v127 = vld [vmem:[#allocation13 + $0x1a8] sm:$0xff]
    %v128 = vld [vmem:[#allocation13 + $0x1b0] sm:$0xff]
    %v129 = vld [vmem:[#allocation13 + $0x1b8] sm:$0xff]
    %v130 = vld [vmem:[#allocation13 + $0x1c0] sm:$0xff]
    %v131 = vld [vmem:[#allocation13 + $0x1c8] sm:$0xff]
    %v132 = vld [vmem:[#allocation13 + $0x1d0] sm:$0xff]
    %v133 = vld [vmem:[#allocation13 + $0x1d8] sm:$0xff]
    %v134 = vld [vmem:[#allocation13 + $0x1e0] sm:$0xff]
    %v135 = vld [vmem:[#allocation13 + $0x1e8] sm:$0xff]
    %v136 = vld [vmem:[#allocation13 + $0x1f0] sm:$0xff]
    %v137 = vld [vmem:[#allocation13 + $0x1f8] sm:$0xff]
    %v138 = vld [vmem:[#allocation13 + $0x200] sm:$0xff]
    %v139 = vld [vmem:[#allocation13 + $0x208] sm:$0xff]
    %v140 = vld [vmem:[#allocation13 + $0x210] sm:$0xff]
    %v141 = vld [vmem:[#allocation13 + $0x218] sm:$0xff]
    %v142 = vld [vmem:[#allocation13 + $0x220] sm:$0xff]
    %v143 = vld [vmem:[#allocation13 + $0x228] sm:$0xff]
    %v144 = vld [vmem:[#allocation13 + $0x230] sm:$0xff]
    %v145 = vld [vmem:[#allocation13 + $0x238] sm:$0xff]
    %v146 = vld [vmem:[#allocation13 + $0x240] sm:$0xff]
    %v147 = vld [vmem:[#allocation13 + $0x248] sm:$0xff]
    %v148 = vld [vmem:[#allocation13 + $0x250] sm:$0xff]
    %v149 = vld [vmem:[#allocation13 + $0x258] sm:$0xff]
    %v150 = vld [vmem:[#allocation13 + $0x260] sm:$0xff]
    %v151 = vld [vmem:[#allocation13 + $0x268] sm:$0xff]
    %v152 = vld [vmem:[#allocation13 + $0x270] sm:$0xff]
    %v153 = vld [vmem:[#allocation13 + $0x278] sm:$0xff]
    %154 = vmatprep.subr.mxu0 %v150
    %155 = vmatpush1.msra.mxu0 %v149
    %156 = vmatprep.subr.mxu0 %v145
    %157 = vmatpush1.msra.mxu0 %v144
    %158 = vmatprep.subr.mxu0 %v140
    %159 = vmatpush1.msra.mxu0 %v139
    %160 = vmatprep.subr.mxu0 %v135
    %161 = vmatpush1.msra.mxu0 %v134
    %162 = vmatprep.subr.mxu0 %v130
    %163 = vmatpush1.msra.mxu0 %v129
    %164 = vmatprep.subr.mxu0 %v125
    %165 = vmatpush1.msra.mxu0 %v124
    %166 = vmatprep.subr.mxu0 %v120
    %167 = vmatpush1.msra.mxu0 %v119
    %168 = vmatprep.subr.mxu0 %v115
    %169 = vmatpush1.msra.mxu0 %v114
    %170 = vmatprep.subr.mxu0 %v110
    %171 = vmatpush1.msra.mxu0 %v109
    %172 = vmatprep.subr.mxu0 %v105
    %173 = vmatpush1.msra.mxu0 %v104
    %174 = vmatprep.subr.mxu0 %v100
    %175 = vmatpush1.msra.mxu0 %v99
    %176 = vmatprep.subr.mxu0 %v95
    %177 = vmatpush1.msra.mxu0 %v94
    %178 = vmatprep.subr.mxu0 %v90
    %179 = vmatpush1.msra.mxu0 %v89
    %180 = vmatprep.subr.mxu0 %v85
    %181 = vmatpush1.msra.mxu0 %v84
    %182 = vmatprep.subr.mxu0 %v80
    %183 = vmatpush1.msra.mxu0 %v79
    %184 = vmatprep.subr.mxu0 %v75
    %185 = vmatpush1.msra.mxu0 %v74
    %186 = vmatprep.subr.mxu0 0.0
    %187 = vmatpush2.msra.mxu0 0.0
    %188 = vmatprep.subr.mxu0 0.0
    %189 = vmatpush2.msra.mxu0 0.0
    %190 = vmatprep.subr.mxu0 0.0
    %191 = vmatpush2.msra.mxu0 0.0
    %192 = vmatprep.subr.mxu0 0.0
    %193 = vmatpush2.msra.mxu0 0.0
    %194 = vmatprep.subr.mxu0 0.0
    %195 = vmatpush2.msra.mxu0 0.0
    %196 = vmatprep.subr.mxu0 0.0
    %197 = vmatpush2.msra.mxu0 0.0
    %198 = vmatprep.subr.mxu0 0.0
    %199 = vmatpush2.msra.mxu0 0.0
    %200 = vmatprep.subr.mxu0 0.0
    %201 = vmatpush2.msra.mxu0 0.0
    %202 = vmatprep.subr.mxu0 0.0
    %203 = vmatpush2.msra.mxu0 0.0
    %204 = vmatprep.subr.mxu0 0.0
    %205 = vmatpush2.msra.mxu0 0.0
    %206 = vmatprep.subr.mxu0 0.0
    %207 = vmatpush2.msra.mxu0 0.0
    %208 = vmatprep.subr.mxu0 0.0
    %209 = vmatpush2.msra.mxu0 0.0
    %210 = vmatprep.subr.mxu0 0.0
    %211 = vmatpush2.msra.mxu0 0.0
    %212 = vmatprep.subr.mxu0 0.0
    %213 = vmatpush2.msra.mxu0 0.0
    %214 = vmatprep.subr.mxu0 0.0
    %215 = vmatpush2.msra.mxu0 0.0
    %216 = vmatprep.subr.mxu0 0.0
    %217 = vmatpush2.msra.mxu0 0.0
    %218 = vmatprep.mubr.f32.mxu0 0.0
    %219 = vmatmul.mubr.f32.gmra.mxu0 %v70
    %v220 = vpop.f32.mrf.mxu0
    %v221 = vadd.f32 0.0, %v220
    %v222 = vpop.f32.mrf.mxu0
    %v223 = vadd.f32 0.0, %v222
    %224 = vmatprep.mubr.f32.mxu0 0.0
    %225 = vmatmul.mubr.f32.gmra.mxu0 %v71
    %v226 = vpop.f32.mrf.mxu0
    %v227 = vadd.f32 0.0, %v226
    %v228 = vpop.f32.mrf.mxu0
    %v229 = vadd.f32 0.0, %v228
    %230 = vmatprep.mubr.f32.mxu0 0.0
    %231 = vmatmul.mubr.f32.gmra.mxu0 %v72
    %v232 = vpop.f32.mrf.mxu0
    %v233 = vadd.f32 0.0, %v232
    %v234 = vpop.f32.mrf.mxu0
    %v235 = vadd.f32 0.0, %v234
    %236 = vmatprep.mubr.f32.mxu0 0.0
    %237 = vmatmul.mubr.f32.gmra.mxu0 %v73
    %v238 = vpop.f32.mrf.mxu0
    %v239 = vadd.f32 0.0, %v238
    %v240 = vpop.f32.mrf.mxu0
    %v241 = vadd.f32 0.0, %v240
    %242 = vdwg.mxu0
    %243 = vmatprep.subr.mxu0 %v152
    %244 = vmatpush1.msra.mxu0 %v151
    %245 = vmatprep.subr.mxu0 %v147
    %246 = vmatpush1.msra.mxu0 %v146
    %247 = vmatprep.subr.mxu0 %v142
    %248 = vmatpush1.msra.mxu0 %v141
    %249 = vmatprep.subr.mxu0 %v137
    %250 = vmatpush1.msra.mxu0 %v136
    %251 = vmatprep.subr.mxu0 %v132
    %252 = vmatpush1.msra.mxu0 %v131
    %253 = vmatprep.subr.mxu0 %v127
    %254 = vmatpush1.msra.mxu0 %v126
    %255 = vmatprep.subr.mxu0 %v122
    %256 = vmatpush1.msra.mxu0 %v121
    %257 = vmatprep.subr.mxu0 %v117
    %258 = vmatpush1.msra.mxu0 %v116
    %259 = vmatprep.subr.mxu0 %v112
    %260 = vmatpush1.msra.mxu0 %v111
    %261 = vmatprep.subr.mxu0 %v107
    %262 = vmatpush1.msra.mxu0 %v106
    %263 = vmatprep.subr.mxu0 %v102
    %264 = vmatpush1.msra.mxu0 %v101
    %265 = vmatprep.subr.mxu0 %v97
    %266 = vmatpush1.msra.mxu0 %v96
    %267 = vmatprep.subr.mxu0 %v92
    %268 = vmatpush1.msra.mxu0 %v91
    %269 = vmatprep.subr.mxu0 %v87
    %270 = vmatpush1.msra.mxu0 %v86
    %271 = vmatprep.subr.mxu0 %v82
    %272 = vmatpush1.msra.mxu0 %v81
    %273 = vmatprep.subr.mxu0 %v77
    %274 = vmatpush1.msra.mxu0 %v76
    %275 = vmatprep.subr.mxu0 0.0
    %276 = vmatpush2.msra.mxu0 0.0
    %277 = vmatprep.subr.mxu0 0.0
    %278 = vmatpush2.msra.mxu0 0.0
    %279 = vmatprep.subr.mxu0 0.0
    %280 = vmatpush2.msra.mxu0 0.0
    %281 = vmatprep.subr.mxu0 0.0
    %282 = vmatpush2.msra.mxu0 0.0
    %283 = vmatprep.subr.mxu0 0.0
    %284 = vmatpush2.msra.mxu0 0.0
    %285 = vmatprep.subr.mxu0 0.0
    %286 = vmatpush2.msra.mxu0 0.0
    %287 = vmatprep.subr.mxu0 0.0
    %288 = vmatpush2.msra.mxu0 0.0
    %289 = vmatprep.subr.mxu0 0.0
    %290 = vmatpush2.msra.mxu0 0.0
    %291 = vmatprep.subr.mxu0 0.0
    %292 = vmatpush2.msra.mxu0 0.0
    %293 = vmatprep.subr.mxu0 0.0
    %294 = vmatpush2.msra.mxu0 0.0
    %295 = vmatprep.subr.mxu0 0.0
    %296 = vmatpush2.msra.mxu0 0.0
    %297 = vmatprep.subr.mxu0 0.0
    %298 = vmatpush2.msra.mxu0 0.0
    %299 = vmatprep.subr.mxu0 0.0
    %300 = vmatpush2.msra.mxu0 0.0
    %301 = vmatprep.subr.mxu0 0.0
    %302 = vmatpush2.msra.mxu0 0.0
    %303 = vmatprep.subr.mxu0 0.0
    %304 = vmatpush2.msra.mxu0 0.0
    %305 = vmatprep.subr.mxu0 0.0
    %306 = vmatpush2.msra.mxu0 0.0
    %307 = vmatprep.mubr.f32.mxu0 0.0
    %308 = vmatmul.mubr.f32.gmra.mxu0 %v70
    %v309 = vpop.f32.mrf.mxu0
    %v310 = vadd.f32 0.0, %v309
    %v311 = vpop.f32.mrf.mxu0
    %v312 = vadd.f32 0.0, %v311
    %313 = vmatprep.mubr.f32.mxu0 0.0
    %314 = vmatmul.mubr.f32.gmra.mxu0 %v71
    %v315 = vpop.f32.mrf.mxu0
    %v316 = vadd.f32 0.0, %v315
    %v317 = vpop.f32.mrf.mxu0
    %v318 = vadd.f32 0.0, %v317
    %319 = vmatprep.mubr.f32.mxu0 0.0
    %320 = vmatmul.mubr.f32.gmra.mxu0 %v72
    %v321 = vpop.f32.mrf.mxu0
    %v322 = vadd.f32 0.0, %v321
    %v323 = vpop.f32.mrf.mxu0
    %v324 = vadd.f32 0.0, %v323
    %325 = vmatprep.mubr.f32.mxu0 0.0
    %326 = vmatmul.mubr.f32.gmra.mxu0 %v73
    %v327 = vpop.f32.mrf.mxu0
    %v328 = vadd.f32 0.0, %v327
    %v329 = vpop.f32.mrf.mxu0
    %v330 = vadd.f32 0.0, %v329
    %331 = vdwg.mxu0
    %332 = vmatprep.subr.mxu0 0.0
    %333 = vmatpush1.msra.mxu0 %v153
    %334 = vmatprep.subr.mxu0 0.0
    %335 = vmatpush1.msra.mxu0 %v148
    %336 = vmatprep.subr.mxu0 0.0
    %337 = vmatpush1.msra.mxu0 %v143
    %338 = vmatprep.subr.mxu0 0.0
    %339 = vmatpush1.msra.mxu0 %v138
    %340 = vmatprep.subr.mxu0 0.0
    %341 = vmatpush1.msra.mxu0 %v133
    %342 = vmatprep.subr.mxu0 0.0
    %343 = vmatpush1.msra.mxu0 %v128
    %344 = vmatprep.subr.mxu0 0.0
    %345 = vmatpush1.msra.mxu0 %v123
    %346 = vmatprep.subr.mxu0 0.0
    %347 = vmatpush1.msra.mxu0 %v118
    %348 = vmatprep.subr.mxu0 0.0
    %349 = vmatpush1.msra.mxu0 %v113
    %350 = vmatprep.subr.mxu0 0.0
    %351 = vmatpush1.msra.mxu0 %v108
    %352 = vmatprep.subr.mxu0 0.0
    %353 = vmatpush1.msra.mxu0 %v103
    %354 = vmatprep.subr.mxu0 0.0
    %355 = vmatpush1.msra.mxu0 %v98
    %356 = vmatprep.subr.mxu0 0.0
    %357 = vmatpush1.msra.mxu0 %v93
    %358 = vmatprep.subr.mxu0 0.0
    %359 = vmatpush1.msra.mxu0 %v88
    %360 = vmatprep.subr.mxu0 0.0
    %361 = vmatpush1.msra.mxu0 %v83
    %362 = vmatprep.subr.mxu0 0.0
    %363 = vmatpush1.msra.mxu0 %v78
    %364 = vmatprep.subr.mxu0 0.0
    %365 = vmatpush2.msra.mxu0 0.0
    %366 = vmatprep.subr.mxu0 0.0
    %367 = vmatpush2.msra.mxu0 0.0
    %368 = vmatprep.subr.mxu0 0.0
    %369 = vmatpush2.msra.mxu0 0.0
    %370 = vmatprep.subr.mxu0 0.0
    %371 = vmatpush2.msra.mxu0 0.0
    %372 = vmatprep.subr.mxu0 0.0
    %373 = vmatpush2.msra.mxu0 0.0
    %374 = vmatprep.subr.mxu0 0.0
    %375 = vmatpush2.msra.mxu0 0.0
    %376 = vmatprep.subr.mxu0 0.0
    %377 = vmatpush2.msra.mxu0 0.0
    %378 = vmatprep.subr.mxu0 0.0
    %379 = vmatpush2.msra.mxu0 0.0
    %380 = vmatprep.subr.mxu0 0.0
    %381 = vmatpush2.msra.mxu0 0.0
    %382 = vmatprep.subr.mxu0 0.0
    %383 = vmatpush2.msra.mxu0 0.0
    %384 = vmatprep.subr.mxu0 0.0
    %385 = vmatpush2.msra.mxu0 0.0
    %386 = vmatprep.subr.mxu0 0.0
    %387 = vmatpush2.msra.mxu0 0.0
    %388 = vmatprep.subr.mxu0 0.0
    %389 = vmatpush2.msra.mxu0 0.0
    %390 = vmatprep.subr.mxu0 0.0
    %391 = vmatpush2.msra.mxu0 0.0
    %392 = vmatprep.subr.mxu0 0.0
    %393 = vmatpush2.msra.mxu0 0.0
    %394 = vmatprep.subr.mxu0 0.0
    %395 = vmatpush2.msra.mxu0 0.0
    %396 = vmatprep.mubr.f32.mxu0 0.0
    %397 = vmatmul.mubr.f32.gmra.mxu0 %v70
    %v398 = vpop.f32.mrf.mxu0
    %v399 = vadd.f32 0.0, %v398
    %v400 = vpop.f32.mrf.mxu0
    %401 = vmatprep.mubr.f32.mxu0 0.0
    %402 = vmatmul.mubr.f32.gmra.mxu0 %v71
    %v403 = vpop.f32.mrf.mxu0
    %v404 = vadd.f32 0.0, %v403
    %v405 = vpop.f32.mrf.mxu0
    %406 = vmatprep.mubr.f32.mxu0 0.0
    %407 = vmatmul.mubr.f32.gmra.mxu0 %v72
    %v408 = vpop.f32.mrf.mxu0
    %v409 = vadd.f32 0.0, %v408
    %v410 = vpop.f32.mrf.mxu0
    %411 = vmatprep.mubr.f32.mxu0 0.0
    %412 = vmatmul.mubr.f32.gmra.mxu0 %v73
    %v413 = vpop.f32.mrf.mxu0
    %v414 = vadd.f32 0.0, %v413
    %v415 = vpop.f32.mrf.mxu0
    %416 = vdwg.mxu0
    %v417 = vld [vmem:[%s3] sm:$0x1f]
    %v419 = vlaneseq
    %v420 = vshrl.u32 %v419, 7
    %v421 = vsub.s32 0, %v420
    %v422 = vrot.slane %v417, %v421
    %v423 = vlaneseq
    %v424 = vshrl.u32 %v423, 7
    %v425 = vsub.s32 1, %v424
    %v426 = vrot.slane %v417, %v425
    %v427 = vlaneseq
    %v428 = vshrl.u32 %v427, 7
    %v429 = vsub.s32 2, %v428
    %v430 = vrot.slane %v417, %v429
    %v431 = vlaneseq
    %v432 = vshrl.u32 %v431, 7
    %v433 = vsub.s32 3, %v432
    %v434 = vrot.slane %v417, %v433
    %v435 = vlaneseq
    %v436 = vshrl.u32 %v435, 7
    %v437 = vsub.s32 4, %v436
    %v438 = vrot.slane %v417, %v437
    %v444 = vmul.f32 %v221, %v422
    %v445 = vmul.f32 %v223, %v426
    %v446 = vmul.f32 %v310, %v430
    %v447 = vmul.f32 %v312, %v434
    %v448 = vmul.f32 %v399, %v438
    %v449 = vmul.f32 %v227, %v422
    %v450 = vmul.f32 %v229, %v426
    %v451 = vmul.f32 %v316, %v430
    %v452 = vmul.f32 %v318, %v434
    %v453 = vmul.f32 %v404, %v438
    %v454 = vld [vmem:[%s4] sm:$0x1f]
    %v456 = vlaneseq
    %v457 = vshrl.u32 %v456, 7
    %v458 = vsub.s32 0, %v457
    %v459 = vrot.slane %v454, %v458
    %v460 = vlaneseq
    %v461 = vshrl.u32 %v460, 7
    %v462 = vsub.s32 1, %v461
    %v463 = vrot.slane %v454, %v462
    %v464 = vlaneseq
    %v465 = vshrl.u32 %v464, 7
    %v466 = vsub.s32 2, %v465
    %v467 = vrot.slane %v454, %v466
    %v468 = vlaneseq
    %v469 = vshrl.u32 %v468, 7
    %v470 = vsub.s32 3, %v469
    %v471 = vrot.slane %v454, %v470
    %v472 = vlaneseq
    %v473 = vshrl.u32 %v472, 7
    %v474 = vsub.s32 4, %v473
    %v475 = vrot.slane %v454, %v474
    %v481 = vadd.f32 %v444, %v459
    %v482 = vadd.f32 %v445, %v463
    %v483 = vadd.f32 %v446, %v467
    %v484 = vadd.f32 %v447, %v471
    %v485 = vadd.f32 %v448, %v475
    %v486 = vadd.f32 %v449, %v459
    %v487 = vadd.f32 %v450, %v463
    %v488 = vadd.f32 %v451, %v467
    %v489 = vadd.f32 %v452, %v471
    %v490 = vadd.f32 %v453, %v475
    %v491 = vadd.f32 %v233, %v459
    %v492 = vadd.f32 %v235, %v463
    %v493 = vadd.f32 %v322, %v467
    %v494 = vadd.f32 %v324, %v471
    %v495 = vadd.f32 %v409, %v475
    %v496 = vadd.f32 %v239, %v459
    %v497 = vadd.f32 %v241, %v463
    %v498 = vadd.f32 %v328, %v467
    %v499 = vadd.f32 %v330, %v471
    %v500 = vadd.f32 %v414, %v475
    %v501 = vld [vmem:[%s1] sm:$0xff]
    %v502 = vld [vmem:[%s1 + $0x8] sm:$0xff]
    %s503 = smul.u32 0, 640
    %v504 = vlaneseq
    %v505 = vand.u32 %v504, 127
    %v506 = vadd.s32 %v505, 128
    %v507 = vadd.s32 %v505, 256
    %v508 = vadd.s32 %v505, 384
    %v509 = vadd.s32 %v505, 512
    %v510 = vstv %s503
    %v511 = vadd.s32 %v510, %v505
    %v512 = vadd.s32 %v510, %v506
    %v513 = vadd.s32 %v510, %v507
    %v514 = vadd.s32 %v510, %v508
    %v515 = vadd.s32 %v510, %v509
    %516 = vset.pattern.permute.xlu0 0
    %517 = vperm.xlu0 %516, %v501
    %v518 = vpop.permute.xlu0 %517
    %519 = vset.pattern.permute.xlu0 0
    %520 = vperm.xlu0 %519, %v502
    %v521 = vpop.permute.xlu0 %520
    %vm522 = vcmp.eq.s32.totalorder %v511, %v518
    %vm523 = vcmp.eq.s32.totalorder %v512, %v518
    %vm524 = vcmp.eq.s32.totalorder %v513, %v518
    %vm525 = vcmp.eq.s32.totalorder %v514, %v518
    %vm526 = vcmp.eq.s32.totalorder %v515, %v518
    %vm527 = vcmp.eq.s32.totalorder %v511, %v521
    %vm528 = vcmp.eq.s32.totalorder %v512, %v521
    %vm529 = vcmp.eq.s32.totalorder %v513, %v521
    %vm530 = vcmp.eq.s32.totalorder %v514, %v521
    %vm531 = vcmp.eq.s32.totalorder %v515, %v521
    %v532 = vsel %vm522, %v481, 0.0
    %v533 = vsel %vm523, %v482, 0.0
    %v534 = vsel %vm524, %v483, 0.0
    %v535 = vsel %vm525, %v484, 0.0
    %v536 = vsel %vm526, %v485, 0.0
    %v537 = vsel %vm527, %v486, 0.0
    %v538 = vsel %vm528, %v487, 0.0
    %v539 = vsel %vm529, %v488, 0.0
    %v540 = vsel %vm530, %v489, 0.0
    %v541 = vsel %vm531, %v490, 0.0
    %v542 = vadd.f32 %v532, %v533
    %v543 = vadd.f32 %v542, %v534
    %v544 = vadd.f32 %v543, %v535
    %v545 = vadd.f32 %v544, %v536
    %546 = vadd.xlane.f32.xlu0 %v545
    %v547 = vpop.xlane.xlu0 %546
    %v548 = vadd.f32 %v537, %v538
    %v549 = vadd.f32 %v548, %v539
    %v550 = vadd.f32 %v549, %v540
    %v551 = vadd.f32 %v550, %v541
    %552 = vadd.xlane.f32.xlu0 %v551
    %v553 = vpop.xlane.xlu0 %552
    %v554 = vmul.f32 %v547, 0.06666667
    %v555 = vmul.f32 %v553, 0.06666667
    %v556 = vmul.f32 %v554, %v554
    %v557 = vmul.f32 %v555, %v555
    %v558 = vsub.f32 1.0, %v556
    %v559 = vsub.f32 1.0, %v557
    %v560 = vmax.f32 %v558, 0.0
    %v561 = vmax.f32 %v559, 0.0
    %v562 = vmin.f32 %v560, 1.0
    %v563 = vmin.f32 %v561, 1.0
    %v564 = vrsqrt.pop %v562
    %v565 = vmul.f32 %v562, %v564
    %vm566 = vcmp.eq.f32.partialorder %v562, inf
    %v567 = vsel %vm566, %v562, %v565
    %vm568 = vcmp.eq.f32.partialorder %v562, 0.0
    %v569 = vand.u32 %v562, 2147483648
    %v570 = vsel %vm568, %v569, %v567
    %v571 = vrsqrt.pop %v563
    %v572 = vmul.f32 %v563, %v571
    %vm573 = vcmp.eq.f32.partialorder %v563, inf
    %v574 = vsel %vm573, %v563, %v572
    %vm575 = vcmp.eq.f32.partialorder %v563, 0.0
    %v576 = vand.u32 %v563, 2147483648
    %v577 = vsel %vm575, %v576, %v574
    %v578 = vmul.f32 %v554, 0.9553365
    %v579 = vmul.f32 %v555, 0.9553365
    %v580 = vmul.f32 %v570, 0.29552022
    %v581 = vmul.f32 %v577, 0.29552022
    %v582 = vsub.f32 %v578, %v580
    %v583 = vsub.f32 %v579, %v581
    %v584 = vsub.f32 %v554, -0.9553365
    %v585 = vsub.f32 %v555, -0.9553365
    %vm586 = vcmp.gt.f32.partialorder %v584, 0.0
    %vm587 = vcmp.gt.f32.partialorder %v585, 0.0
    %v588 = vsub.f32 %v554, 0.08865606
    %v589 = vsub.f32 %v555, 0.08865606
    %v590 = vsel %vm586, %v582, %v588
    %v591 = vsel %vm587, %v583, %v589
    %v592 = vmul.f32 %v590, 15.0
    %v593 = vmul.f32 %v591, 15.0
    %v594 = vsel %vm522, %v592, %v481
    %v595 = vsel %vm523, %v592, %v482
    %v596 = vsel %vm524, %v592, %v483
    %v597 = vsel %vm525, %v592, %v484
    %v598 = vsel %vm526, %v592, %v485
    %v599 = vsel %vm527, %v593, %v486
    %v600 = vsel %vm528, %v593, %v487
    %v601 = vsel %vm529, %v593, %v488
    %v602 = vsel %vm530, %v593, %v489
    %v603 = vsel %vm531, %v593, %v490
    %v604 = vmax.f32 %v594, %v596
    %v605 = vmax.f32 %v595, %v597
    %v606 = vmax.f32 %v604, %v598
    %v607 = vmax.f32 %v606, %v605
    %608 = vmax.xlane.f32.xlu0 %v607
    %v609 = vpop.xlane.xlu0 %608
    %v610 = vmax.f32 %v599, %v601
    %v611 = vmax.f32 %v600, %v602
    %v612 = vmax.f32 %v610, %v603
    %v613 = vmax.f32 %v612, %v611
    %614 = vmax.xlane.f32.xlu0 %v613
    %v615 = vpop.xlane.xlu0 %614
    %vm616 = vcmp.ge.f32.partialorder %v594, %v609
    %vm617 = vcmp.ge.f32.partialorder %v595, %v609
    %vm618 = vcmp.ge.f32.partialorder %v596, %v609
    %vm619 = vcmp.ge.f32.partialorder %v597, %v609
    %vm620 = vcmp.ge.f32.partialorder %v598, %v609
    %vm621 = vcmp.ge.f32.partialorder %v599, %v615
    %vm622 = vcmp.ge.f32.partialorder %v600, %v615
    %vm623 = vcmp.ge.f32.partialorder %v601, %v615
    %vm624 = vcmp.ge.f32.partialorder %v602, %v615
    %vm625 = vcmp.ge.f32.partialorder %v603, %v615
    %v626 = vsel %vm616, %v511, 1073741824
    %v627 = vsel %vm617, %v512, 1073741824
    %v628 = vsel %vm618, %v513, 1073741824
    %v629 = vsel %vm619, %v514, 1073741824
    %v630 = vsel %vm620, %v515, 1073741824
    %v631 = vsel %vm621, %v511, 1073741824
    %v632 = vsel %vm622, %v512, 1073741824
    %v633 = vsel %vm623, %v513, 1073741824
    %v634 = vsel %vm624, %v514, 1073741824
    %v635 = vsel %vm625, %v515, 1073741824
    %vm636 = vcmp.lt.s32.totalorder %v626, %v628
    %v637 = vsel %vm636, %v626, %v628
    %vm638 = vcmp.lt.s32.totalorder %v627, %v629
    %v639 = vsel %vm638, %v627, %v629
    %vm640 = vcmp.lt.s32.totalorder %v637, %v630
    %v641 = vsel %vm640, %v637, %v630
    %vm642 = vcmp.lt.s32.totalorder %v641, %v639
    %v643 = vsel %vm642, %v641, %v639
    %v644 = vand.u32 %v643, 65535
    %v645 = vshra.s32 %v643, 16
    %v646 = vcvt.s32.f32 %v644
    %v647 = vcvt.s32.f32 %v645
    %648 = vmin.xlane.f32.xlu0 %v647
    %v649 = vpop.xlane.xlu0 %648
    %vm650 = vcmp.eq.f32.partialorder %v647, %v649
    %v651 = vsel %vm650, %v646, inf
    %652 = vmin.xlane.f32.xlu0 %v651
    %v653 = vpop.xlane.xlu0 %652
    %v654 = vcvt.f32.s32 %v653
    %v655 = vcvt.f32.s32 %v649
    %v656 = vshll.u32 %v655, 16
    %v657 = vadd.s32 %v656, %v654
    %vm658 = vcmp.lt.s32.totalorder %v631, %v633
    %v659 = vsel %vm658, %v631, %v633
    %vm660 = vcmp.lt.s32.totalorder %v632, %v634
    %v661 = vsel %vm660, %v632, %v634
    %vm662 = vcmp.lt.s32.totalorder %v659, %v635
    %v663 = vsel %vm662, %v659, %v635
    %vm664 = vcmp.lt.s32.totalorder %v663, %v661
    %v665 = vsel %vm664, %v663, %v661
    %v666 = vand.u32 %v665, 65535
    %v667 = vshra.s32 %v665, 16
    %v668 = vcvt.s32.f32 %v666
    %v669 = vcvt.s32.f32 %v667
    %670 = vmin.xlane.f32.xlu0 %v669
    %v671 = vpop.xlane.xlu0 %670
    %vm672 = vcmp.eq.f32.partialorder %v669, %v671
    %v673 = vsel %vm672, %v668, inf
    %674 = vmin.xlane.f32.xlu0 %v673
    %v675 = vpop.xlane.xlu0 %674
    %v676 = vcvt.f32.s32 %v675
    %v677 = vcvt.f32.s32 %v671
    %v678 = vshll.u32 %v677, 16
    %v679 = vadd.s32 %v678, %v676
    %v680 = vld [vmem:[#allocation2] sm:$0xff]
    %v681 = vld [vmem:[#allocation2 + $0x8] sm:$0xff]
    %vm682 = vcmp.gt.f32.partialorder %v609, %v680
    %vm683 = vcmp.gt.f32.partialorder %v615, %v681
    %v684 = vld [vmem:[#allocation5] sm:$0xff]
    %v685 = vld [vmem:[#allocation5 + $0x8] sm:$0xff]
    %v686 = vsel %vm682, %v657, %v684
    %v687 = vsel %vm683, %v679, %v685
    %vm688 = vcmask 7168
    %689 = vst.msk [vmem:[#allocation5] sm:$0xff] %vm688, %v686
    %690 = vst.msk [vmem:[#allocation5 + $0x8] sm:$0xff] %vm688, %v687
    %v691 = vld [vmem:[#allocation2] sm:$0xff]
    %v692 = vld [vmem:[#allocation2 + $0x8] sm:$0xff]
    %v693 = vmax.f32 %v691, %v609
    %v694 = vmax.f32 %v692, %v615
    %v695 = vsub.f32 %v691, %v693
    %v696 = vsub.f32 %v692, %v694
    %v697 = vmul.f32 %v695, 1.442695
    %v698 = vpow.pop %v697
    %v699 = vmul.f32 %v696, 1.442695
    %v700 = vpow.pop %v699
    %v701 = vld [vmem:[#allocation3] sm:$0xff]
    %v702 = vld [vmem:[#allocation3 + $0x8] sm:$0xff]
    %v703 = vmul.f32 %v698, %v701
    %v704 = vmul.f32 %v700, %v702
    %706 = vset.pattern.permute.xlu0 0
    %707 = vperm.xlu0 %706, %v693
    %v708 = vpop.permute.xlu0 %707
    %711 = vset.pattern.permute.xlu0 0
    %712 = vperm.xlu0 %711, %v694
    %v713 = vpop.permute.xlu0 %712
    %v715 = vsub.f32 %v594, %v708
    %v716 = vsub.f32 %v595, %v708
    %v717 = vsub.f32 %v596, %v708
    %v718 = vsub.f32 %v597, %v708
    %v719 = vsub.f32 %v598, %v708
    %v720 = vsub.f32 %v599, %v713
    %v721 = vsub.f32 %v600, %v713
    %v722 = vsub.f32 %v601, %v713
    %v723 = vsub.f32 %v602, %v713
    %v724 = vsub.f32 %v603, %v713
    %v725 = vmul.f32 %v715, 1.442695
    %v726 = vpow.pop %v725
    %v727 = vmul.f32 %v716, 1.442695
    %v728 = vpow.pop %v727
    %v729 = vmul.f32 %v717, 1.442695
    %v730 = vpow.pop %v729
    %v731 = vmul.f32 %v718, 1.442695
    %v732 = vpow.pop %v731
    %v733 = vmul.f32 %v719, 1.442695
    %v734 = vpow.pop %v733
    %v735 = vmul.f32 %v720, 1.442695
    %v736 = vpow.pop %v735
    %v737 = vmul.f32 %v721, 1.442695
    %v738 = vpow.pop %v737
    %v739 = vmul.f32 %v722, 1.442695
    %v740 = vpow.pop %v739
    %v741 = vmul.f32 %v723, 1.442695
    %v742 = vpow.pop %v741
    %v743 = vmul.f32 %v724, 1.442695
    %v744 = vpow.pop %v743
    %v745 = vadd.f32 %v726, %v728
    %v746 = vadd.f32 %v745, %v730
    %v747 = vadd.f32 %v746, %v732
    %v748 = vadd.f32 %v747, %v734
    %749 = vadd.xlane.f32.xlu0 %v748
    %v750 = vpop.xlane.xlu0 %749
    %v751 = vadd.f32 %v736, %v738
    %v752 = vadd.f32 %v751, %v740
    %v753 = vadd.f32 %v752, %v742
    %v754 = vadd.f32 %v753, %v744
    %755 = vadd.xlane.f32.xlu0 %v754
    %v756 = vpop.xlane.xlu0 %755
    %v757 = vadd.f32 %v703, %v750
    %v758 = vadd.f32 %v704, %v756
    %759 = vst.msk [vmem:[#allocation3] sm:$0xff] %vm688, %v757
    %760 = vst.msk [vmem:[#allocation3 + $0x8] sm:$0xff] %vm688, %v758
    %761 = vst.msk [vmem:[#allocation2] sm:$0xff] %vm688, %v693
    %762 = vst.msk [vmem:[#allocation2 + $0x8] sm:$0xff] %vm688, %v694
    %vm763 = vcmp.ge.s32.totalorder %v501, %v510
    %vm764 = vcmp.ge.s32.totalorder %v502, %v510
    %s765 = sadd.s32 0, 1
    %s766 = smul.u32 %s765, 640
    %v767 = vstv %s766
    %vm768 = vcmp.lt.s32.totalorder %v501, %v767
    %vm769 = vcmp.lt.s32.totalorder %v502, %v767
    %vm770 = vmand %vm763, %vm768
    %vm771 = vmand %vm764, %vm769
    %v772 = vld [vmem:[#allocation4] sm:$0xff]
    %v773 = vld [vmem:[#allocation4 + $0x8] sm:$0xff]
    %v774 = vsel %vm770, %v592, 0.0
    %v775 = vsel %vm771, %v593, 0.0
    %v776 = vadd.f32 %v772, %v774
    %v777 = vadd.f32 %v773, %v775
    %778 = vst.msk [vmem:[#allocation4] sm:$0xff] %vm688, %v776
    %779 = vst.msk [vmem:[#allocation4 + $0x8] sm:$0xff] %vm688, %v777
    %v780 = vmax.f32 %v491, %v493
    %v781 = vmax.f32 %v492, %v494
    %v782 = vmax.f32 %v780, %v495
    %v783 = vmax.f32 %v782, %v781
    %784 = vmax.xlane.f32.xlu0 %v783
    %v785 = vpop.xlane.xlu0 %784
    %v786 = vmax.f32 %v496, %v498
    %v787 = vmax.f32 %v497, %v499
    %v788 = vmax.f32 %v786, %v500
    %v789 = vmax.f32 %v788, %v787
    %790 = vmax.xlane.f32.xlu0 %v789
    %v791 = vpop.xlane.xlu0 %790
    %vm792 = vcmp.ge.f32.partialorder %v491, %v785
    %vm793 = vcmp.ge.f32.partialorder %v492, %v785
    %vm794 = vcmp.ge.f32.partialorder %v493, %v785
    %vm795 = vcmp.ge.f32.partialorder %v494, %v785
    %vm796 = vcmp.ge.f32.partialorder %v495, %v785
    %vm797 = vcmp.ge.f32.partialorder %v496, %v791
    %vm798 = vcmp.ge.f32.partialorder %v497, %v791
    %vm799 = vcmp.ge.f32.partialorder %v498, %v791
    %vm800 = vcmp.ge.f32.partialorder %v499, %v791
    %vm801 = vcmp.ge.f32.partialorder %v500, %v791
    %v802 = vsel %vm792, %v511, 1073741824
    %v803 = vsel %vm793, %v512, 1073741824
    %v804 = vsel %vm794, %v513, 1073741824
    %v805 = vsel %vm795, %v514, 1073741824
    %v806 = vsel %vm796, %v515, 1073741824
    %v807 = vsel %vm797, %v511, 1073741824
    %v808 = vsel %vm798, %v512, 1073741824
    %v809 = vsel %vm799, %v513, 1073741824
    %v810 = vsel %vm800, %v514, 1073741824
    %v811 = vsel %vm801, %v515, 1073741824
    %vm812 = vcmp.lt.s32.totalorder %v802, %v804
    %v813 = vsel %vm812, %v802, %v804
    %vm814 = vcmp.lt.s32.totalorder %v803, %v805
    %v815 = vsel %vm814, %v803, %v805
    %vm816 = vcmp.lt.s32.totalorder %v813, %v806
    %v817 = vsel %vm816, %v813, %v806
    %vm818 = vcmp.lt.s32.totalorder %v817, %v815
    %v819 = vsel %vm818, %v817, %v815
    %v820 = vand.u32 %v819, 65535
    %v821 = vshra.s32 %v819, 16
    %v822 = vcvt.s32.f32 %v820
    %v823 = vcvt.s32.f32 %v821
    %824 = vmin.xlane.f32.xlu0 %v823
    %v825 = vpop.xlane.xlu0 %824
    %vm826 = vcmp.eq.f32.partialorder %v823, %v825
    %v827 = vsel %vm826, %v822, inf
    %828 = vmin.xlane.f32.xlu0 %v827
    %v829 = vpop.xlane.xlu0 %828
    %v830 = vcvt.f32.s32 %v829
    %v831 = vcvt.f32.s32 %v825
    %v832 = vshll.u32 %v831, 16
    %v833 = vadd.s32 %v832, %v830
    %vm834 = vcmp.lt.s32.totalorder %v807, %v809
    %v835 = vsel %vm834, %v807, %v809
    %vm836 = vcmp.lt.s32.totalorder %v808, %v810
    %v837 = vsel %vm836, %v808, %v810
    %vm838 = vcmp.lt.s32.totalorder %v835, %v811
    %v839 = vsel %vm838, %v835, %v811
    %vm840 = vcmp.lt.s32.totalorder %v839, %v837
    %v841 = vsel %vm840, %v839, %v837
    %v842 = vand.u32 %v841, 65535
    %v843 = vshra.s32 %v841, 16
    %v844 = vcvt.s32.f32 %v842
    %v845 = vcvt.s32.f32 %v843
    %846 = vmin.xlane.f32.xlu0 %v845
    %v847 = vpop.xlane.xlu0 %846
    %vm848 = vcmp.eq.f32.partialorder %v845, %v847
    %v849 = vsel %vm848, %v844, inf
    %850 = vmin.xlane.f32.xlu0 %v849
    %v851 = vpop.xlane.xlu0 %850
    %v852 = vcvt.f32.s32 %v851
    %v853 = vcvt.f32.s32 %v847
    %v854 = vshll.u32 %v853, 16
    %v855 = vadd.s32 %v854, %v852
    %v856 = vld [vmem:[#allocation6] sm:$0xff]
    %v857 = vld [vmem:[#allocation6 + $0x8] sm:$0xff]
    %vm858 = vcmp.gt.f32.partialorder %v785, %v856
    %vm859 = vcmp.gt.f32.partialorder %v791, %v857
    %v860 = vld [vmem:[#allocation8] sm:$0xff]
    %v861 = vld [vmem:[#allocation8 + $0x8] sm:$0xff]
    %v862 = vsel %vm858, %v833, %v860
    %v863 = vsel %vm859, %v855, %v861
    %864 = vst.msk [vmem:[#allocation8] sm:$0xff] %vm688, %v862
    %865 = vst.msk [vmem:[#allocation8 + $0x8] sm:$0xff] %vm688, %v863
    %vm866 = vcmp.eq.s32.totalorder %v511, %v833
    %vm867 = vcmp.eq.s32.totalorder %v512, %v833
    %vm868 = vcmp.eq.s32.totalorder %v513, %v833
    %vm869 = vcmp.eq.s32.totalorder %v514, %v833
    %vm870 = vcmp.eq.s32.totalorder %v515, %v833
    %vm871 = vcmp.eq.s32.totalorder %v511, %v855
    %vm872 = vcmp.eq.s32.totalorder %v512, %v855
    %vm873 = vcmp.eq.s32.totalorder %v513, %v855
    %vm874 = vcmp.eq.s32.totalorder %v514, %v855
    %vm875 = vcmp.eq.s32.totalorder %v515, %v855
    %v876 = vsel %vm866, %v594, 0.0
    %v877 = vsel %vm867, %v595, 0.0
    %v878 = vsel %vm868, %v596, 0.0
    %v879 = vsel %vm869, %v597, 0.0
    %v880 = vsel %vm870, %v598, 0.0
    %v881 = vsel %vm871, %v599, 0.0
    %v882 = vsel %vm872, %v600, 0.0
    %v883 = vsel %vm873, %v601, 0.0
    %v884 = vsel %vm874, %v602, 0.0
    %v885 = vsel %vm875, %v603, 0.0
    %v886 = vadd.f32 %v876, %v877
    %v887 = vadd.f32 %v886, %v878
    %v888 = vadd.f32 %v887, %v879
    %v889 = vadd.f32 %v888, %v880
    %890 = vadd.xlane.f32.xlu0 %v889
    %v891 = vpop.xlane.xlu0 %890
    %v892 = vadd.f32 %v881, %v882
    %v893 = vadd.f32 %v892, %v883
    %v894 = vadd.f32 %v893, %v884
    %v895 = vadd.f32 %v894, %v885
    %896 = vadd.xlane.f32.xlu0 %v895
    %v897 = vpop.xlane.xlu0 %896
    %v898 = vld [vmem:[#allocation9] sm:$0xff]
    %v899 = vld [vmem:[#allocation9 + $0x8] sm:$0xff]
    %v900 = vsel %vm858, %v891, %v898
    %v901 = vsel %vm859, %v897, %v899
    %902 = vst.msk [vmem:[#allocation9] sm:$0xff] %vm688, %v900
    %903 = vst.msk [vmem:[#allocation9 + $0x8] sm:$0xff] %vm688, %v901
    %v904 = vld [vmem:[#allocation6] sm:$0xff]
    %v905 = vld [vmem:[#allocation6 + $0x8] sm:$0xff]
    %v906 = vmax.f32 %v904, %v785
    %v907 = vmax.f32 %v905, %v791
    %v908 = vsub.f32 %v904, %v906
    %v909 = vsub.f32 %v905, %v907
    %v910 = vmul.f32 %v908, 1.442695
    %v911 = vpow.pop %v910
    %v912 = vmul.f32 %v909, 1.442695
    %v913 = vpow.pop %v912
    %v914 = vld [vmem:[#allocation7] sm:$0xff]
    %v915 = vld [vmem:[#allocation7 + $0x8] sm:$0xff]
    %v916 = vmul.f32 %v911, %v914
    %v917 = vmul.f32 %v913, %v915
    %919 = vset.pattern.permute.xlu0 0
    %920 = vperm.xlu0 %919, %v906
    %v921 = vpop.permute.xlu0 %920
    %924 = vset.pattern.permute.xlu0 0
    %925 = vperm.xlu0 %924, %v907
    %v926 = vpop.permute.xlu0 %925
    %v928 = vsub.f32 %v491, %v921
    %v929 = vsub.f32 %v492, %v921
    %v930 = vsub.f32 %v493, %v921
    %v931 = vsub.f32 %v494, %v921
    %v932 = vsub.f32 %v495, %v921
    %v933 = vsub.f32 %v496, %v926
    %v934 = vsub.f32 %v497, %v926
    %v935 = vsub.f32 %v498, %v926
    %v936 = vsub.f32 %v499, %v926
    %v937 = vsub.f32 %v500, %v926
    %v938 = vmul.f32 %v928, 1.442695
    %v939 = vpow.pop %v938
    %v940 = vmul.f32 %v929, 1.442695
    %v941 = vpow.pop %v940
    %v942 = vmul.f32 %v930, 1.442695
    %v943 = vpow.pop %v942
    %v944 = vmul.f32 %v931, 1.442695
    %v945 = vpow.pop %v944
    %v946 = vmul.f32 %v932, 1.442695
    %v947 = vpow.pop %v946
    %v948 = vmul.f32 %v933, 1.442695
    %v949 = vpow.pop %v948
    %v950 = vmul.f32 %v934, 1.442695
    %v951 = vpow.pop %v950
    %v952 = vmul.f32 %v935, 1.442695
    %v953 = vpow.pop %v952
    %v954 = vmul.f32 %v936, 1.442695
    %v955 = vpow.pop %v954
    %v956 = vmul.f32 %v937, 1.442695
    %v957 = vpow.pop %v956
    %v958 = vadd.f32 %v939, %v941
    %v959 = vadd.f32 %v958, %v943
    %v960 = vadd.f32 %v959, %v945
    %v961 = vadd.f32 %v960, %v947
    %962 = vadd.xlane.f32.xlu0 %v961
    %v963 = vpop.xlane.xlu0 %962
    %v964 = vadd.f32 %v949, %v951
    %v965 = vadd.f32 %v964, %v953
    %v966 = vadd.f32 %v965, %v955
    %v967 = vadd.f32 %v966, %v957
    %968 = vadd.xlane.f32.xlu0 %v967
    %v969 = vpop.xlane.xlu0 %968
    %v970 = vadd.f32 %v916, %v963
    %v971 = vadd.f32 %v917, %v969
    %972 = vst.msk [vmem:[#allocation7] sm:$0xff] %vm688, %v970
    %973 = vst.msk [vmem:[#allocation7 + $0x8] sm:$0xff] %vm688, %v971
    %974 = vst.msk [vmem:[#allocation6] sm:$0xff] %vm688, %v906
    %975 = vst.msk [vmem:[#allocation6 + $0x8] sm:$0xff] %vm688, %v907
    // Predicated region
    $region34: #{tpu_custom_call.1} parent=1 // pred_check
      %p976 = pneg %p49
    $region35: #{tpu_custom_call.1} parent=1 // pred_check_branch
      %978 = sbr.rel (%p976) target = $region37
    $region36: #{tpu_custom_call.1} parent=1 // pred_region
      %v979 = vld [vmem:[#allocation2] sm:$0xff]
      %v980 = vld [vmem:[#allocation2 + $0x8] sm:$0xff]
      %v981 = vld [vmem:[#allocation3] sm:$0xff]
      %v982 = vld [vmem:[#allocation3 + $0x8] sm:$0xff]
      %v983 = vlog2.pop %v981
      %v984 = vmul.f32 %v983, 0.6931472
      %v985 = vlog2.pop %v982
      %v986 = vmul.f32 %v985, 0.6931472
      %v987 = vadd.f32 %v979, %v984
      %v988 = vadd.f32 %v980, %v986
      %v989 = vld [vmem:[#allocation4] sm:$0xff]
      %v990 = vld [vmem:[#allocation4 + $0x8] sm:$0xff]
      %v991 = vsub.f32 %v987, %v989
      %v992 = vsub.f32 %v988, %v990
      %v993 = vld [vmem:[#allocation7] sm:$0xff]
      %v994 = vld [vmem:[#allocation7 + $0x8] sm:$0xff]
      %v995 = vrcp.pop %v993
      %v996 = vmul.f32 1.0, %v995
      %v997 = vrcp.pop %v994
      %v998 = vmul.f32 1.0, %v997
      %vm999 = vcmp.eq.s32.totalorder %v505, 0
      %vm1000 = vcmp.eq.s32.totalorder %v505, 1
      %vm1001 = vcmp.eq.s32.totalorder %v505, 2
      %vm1002 = vcmp.eq.s32.totalorder %v505, 3
      %v1003 = vld [vmem:[#allocation8] sm:$0xff]
      %v1004 = vld [vmem:[#allocation8 + $0x8] sm:$0xff]
      %v1005 = vcvt.s32.f32 %v1003
      %v1006 = vcvt.s32.f32 %v1004
      %vm1007 = vcmp.eq.s32.totalorder %v505, 4
      %v1008 = vld [vmem:[#allocation5] sm:$0xff]
      %v1009 = vld [vmem:[#allocation5 + $0x8] sm:$0xff]
      %v1010 = vcvt.s32.f32 %v1008
      %v1011 = vcvt.s32.f32 %v1009
      %vm1012 = vcmp.eq.s32.totalorder %v505, 5
      %v1013 = vld [vmem:[#allocation9] sm:$0xff]
      %v1014 = vld [vmem:[#allocation9 + $0x8] sm:$0xff]
      %1016 = vset.pattern.permute.xlu0 0
      %1017 = vperm.xlu0 %1016, %v1013
      %v1018 = vpop.permute.xlu0 %1017
      %1021 = vset.pattern.permute.xlu0 0
      %1022 = vperm.xlu0 %1021, %v1014
      %v1023 = vpop.permute.xlu0 %1022
      %v1025 = vsel %vm1012, %v1018, 0.0
      %v1026 = vsel %vm1012, %v1023, 0.0
      %1028 = vset.pattern.permute.xlu0 0
      %1029 = vperm.xlu0 %1028, %v1010
      %v1030 = vpop.permute.xlu0 %1029
      %1033 = vset.pattern.permute.xlu0 0
      %1034 = vperm.xlu0 %1033, %v1011
      %v1035 = vpop.permute.xlu0 %1034
      %v1037 = vsel %vm1007, %v1030, %v1025
      %v1038 = vsel %vm1007, %v1035, %v1026
      %1040 = vset.pattern.permute.xlu0 0
      %1041 = vperm.xlu0 %1040, %v1005
      %v1042 = vpop.permute.xlu0 %1041
      %1045 = vset.pattern.permute.xlu0 0
      %1046 = vperm.xlu0 %1045, %v1006
      %v1047 = vpop.permute.xlu0 %1046
      %v1049 = vsel %vm1002, %v1042, %v1037
      %v1050 = vsel %vm1002, %v1047, %v1038
      %1052 = vset.pattern.permute.xlu0 0
      %1053 = vperm.xlu0 %1052, %v996
      %v1054 = vpop.permute.xlu0 %1053
      %1057 = vset.pattern.permute.xlu0 0
      %1058 = vperm.xlu0 %1057, %v998
      %v1059 = vpop.permute.xlu0 %1058
      %v1061 = vsel %vm1001, %v1054, %v1049
      %v1062 = vsel %vm1001, %v1059, %v1050
      %1064 = vset.pattern.permute.xlu0 0
      %1065 = vperm.xlu0 %1064, %v987
      %v1066 = vpop.permute.xlu0 %1065
      %1069 = vset.pattern.permute.xlu0 0
      %1070 = vperm.xlu0 %1069, %v988
      %v1071 = vpop.permute.xlu0 %1070
      %v1073 = vsel %vm1000, %v1066, %v1061
      %v1074 = vsel %vm1000, %v1071, %v1062
      %1076 = vset.pattern.permute.xlu0 0
      %1077 = vperm.xlu0 %1076, %v991
      %v1078 = vpop.permute.xlu0 %1077
      %1081 = vset.pattern.permute.xlu0 0
      %1082 = vperm.xlu0 %1081, %v992
      %v1083 = vpop.permute.xlu0 %1082
      %v1085 = vsel %vm999, %v1078, %v1073
      %v1086 = vsel %vm999, %v1083, %v1074
      %1087 = vst [vmem:[#allocation15] sm:$0xff] %v1085
      %1088 = vst [vmem:[#allocation15 + $0x8] sm:$0xff] %v1086
    $region37: #{tpu_custom_call.1} parent=1 // pred_fallthru
      _
    // Predicated region
    $region38: #{tpu_custom_call.1} parent=1 // pred_check
      _
    $region39: #{tpu_custom_call.1} parent=1 // pred_check_branch
      %1090 = sbr.rel (0) target = $region41
    $region40: #{tpu_custom_call.1} parent=1 // pred_region
      %s1092 = ssub.s32 256, 256
      %1093 = vsyncadd [#allocation12], %s1092
      %s1094 = sshll.u32 [#allocation15], 4
      %s1095 = int_to_ptr.vmem [resolvable:$true] %s1094
      %1100 = dma.vmem_to_hbm [thread:$0]  %s1095, 256, %s5, [#allocation12], 128, 128, 8
    $region41: #{tpu_custom_call.1} parent=1 // pred_fallthru
      _
    // Predicated region
    $region42: #{tpu_custom_call.1} parent=1 // pred_check
      _
    $region43: #{tpu_custom_call.1} parent=1 // pred_check_branch
      %1102 = sbr.rel (0) target = $region45
    $region44: #{tpu_custom_call.1} parent=1 // pred_region
      %1103 = dma.done [#allocation12], 256
    $region45: #{tpu_custom_call.1} parent=1 // pred_fallthru
      _
    %1104 = vsyncpa [#allocation11], 1
    %1105 = vsyncpa [#allocation14], 1
    %1106 = vsyncpa [#allocation12], 1

</llo_original>
